<compile_context>
chip_gen: v6e
topology: v6e:2x2x1
jax: 0.10.0
libtpu: 0.0.40
codegen_flags: <defaults>
</compile_context>

<pallas_src>
import functools
import math

import jax
import jax.numpy as jnp
import numpy as np
from jax import lax
from jax.experimental import pallas as pl
from jax.experimental.pallas import tpu as pltpu

EPS = 1e-5  # nn.BatchNorm2d default eps


# --------------------------------------------------------------------------------------
# Shared in-kernel helpers
# --------------------------------------------------------------------------------------
def _row_masks(W, lt):
    """Boolean (1, lt) masks: lane is not the first / not the last element of its W-row."""
    posw = lax.broadcasted_iota(jnp.int32, (1, lt), 1) % W
    return posw != 0, posw != (W - 1)


def _conv13(xb, w_mat, not_first, not_last):
    """(1,3) conv along the lane (flattened H*W) axis of a 2-D block.

    xb:        (Cin, Lt)      activation block (lane axis = flattened H*W, whole W-rows)
    w_mat:     (Cout, 3*Cin)  weights, column j = k*Cin + ci  (k=0: x[w-1], 1: x[w], 2: x[w+1])
    not_first: (1, Lt) bool   lane is not w==0 of its row
    not_last:  (1, Lt) bool   lane is not w==W-1 of its row
    """
    cin, lt = xb.shape

    if cin >= 16:
        # MXU path: stack taps and do a single matmul.
        # TODO(synk): pad Cout / 3*Cin to the MXU tile for best cadence on v6e/v7x.
        prev = jnp.where(not_first, pltpu.roll(xb, 1, axis=1), 0.0)
        nxt = jnp.where(not_last, pltpu.roll(xb, lt - 1, axis=1), 0.0)
        taps = jnp.concatenate([prev, xb, nxt], axis=0)               # (3*Cin, Lt)
        return jnp.dot(w_mat, taps, preferred_element_type=jnp.float32)

    # VPU path (small Cin): one tap at a time; per-(tap, ci) outer-product MAC so only
    # one shifted tap is live at a time.
    def accum(tap, k, acc):
        for ci in range(cin):
            col = w_mat[:, k * cin + ci:k * cin + ci + 1]             # (Cout, 1)
            term = col * tap[ci:ci + 1, :]                            # (Cout, Lt)
            acc = term if acc is None else acc + term
        return acc

    acc = accum(jnp.where(not_first, pltpu.roll(xb, 1, axis=1), 0.0), 0, None)   # x[w-1]
    acc = accum(xb, 1, acc)                                                      # x[w]
    acc = accum(jnp.where(not_last, pltpu.roll(xb, lt - 1, axis=1), 0.0), 2, acc)  # x[w+1]
    return acc


# --------------------------------------------------------------------------------------
# Fused single-call kernel (small inputs: everything resident in VMEM)
# --------------------------------------------------------------------------------------
def _fused_kernel(W, inv_cnt, x_ref, w1_ref, w2_ref, g1_ref, bt1_ref, g2_ref, bt2_ref,
                  o_ref, u_scr):
    n_batch, c, lt = x_ref.shape
    not_first, not_last = _row_masks(W, lt)

    # Pass A: conv1 + BN1 batch statistics (conv bias cancels under train-mode BN).
    s1 = jnp.zeros((c, 1), jnp.float32)
    q1 = jnp.zeros((c, 1), jnp.float32)
    for n in range(n_batch):
        u1 = _conv13(x_ref[n], w1_ref[...], not_first, not_last)
        u_scr[n] = u1
        s1 = s1 + jnp.sum(u1, axis=1, keepdims=True)
        q1 = q1 + jnp.sum(u1 * u1, axis=1, keepdims=True)
    mu1 = s1 * inv_cnt
    var1 = jnp.maximum(q1 * inv_cnt - mu1 * mu1, 0.0)                 # biased (train-mode)
    sc1 = g1_ref[...] * lax.rsqrt(var1 + EPS)
    sh1 = bt1_ref[...] - mu1 * sc1

    # Pass B: folded BN1 + ReLU + conv2 + BN2 batch statistics (scratch reused for u2).
    s2 = jnp.zeros((c, 1), jnp.float32)
    q2 = jnp.zeros((c, 1), jnp.float32)
    for n in range(n_batch):
        a1 = jnp.maximum(u_scr[n] * sc1 + sh1, 0.0)
        u2 = _conv13(a1, w2_ref[...], not_first, not_last)
        u_scr[n] = u2
        s2 = s2 + jnp.sum(u2, axis=1, keepdims=True)
        q2 = q2 + jnp.sum(u2 * u2, axis=1, keepdims=True)
    mu2 = s2 * inv_cnt
    var2 = jnp.maximum(q2 * inv_cnt - mu2 * mu2, 0.0)
    sc2 = g2_ref[...] * lax.rsqrt(var2 + EPS)
    sh2 = bt2_ref[...] - mu2 * sc2

    # Pass C: folded BN2 + residual + ReLU.
    for n in range(n_batch):
        o_ref[n] = jnp.maximum(u_scr[n] * sc2 + sh2 + x_ref[n], 0.0)


# --------------------------------------------------------------------------------------
# Tiled 3-pass kernels (large inputs, grid-pipelined)
# --------------------------------------------------------------------------------------
def _bn1_stats_kernel(W, x_ref, w1_ref, sum_ref, sq_ref):
    @pl.when(pl.program_id(1) == 0)                 # per-n partial accumulator init
    def _():
        sum_ref[...] = jnp.zeros_like(sum_ref)
        sq_ref[...] = jnp.zeros_like(sq_ref)

    xb = x_ref[...]
    not_first, not_last = _row_masks(W, xb.shape[1])
    u1 = _conv13(xb, w1_ref[...], not_first, not_last)
    sum_ref[...] += jnp.sum(u1, axis=1, keepdims=True)
    sq_ref[...] += jnp.sum(u1 * u1, axis=1, keepdims=True)


def _bn2_stats_kernel(W, x_ref, w1_ref, sc1_ref, sh1_ref, w2_ref, sum_ref, sq_ref):
    @pl.when(pl.program_id(1) == 0)
    def _():
        sum_ref[...] = jnp.zeros_like(sum_ref)
        sq_ref[...] = jnp.zeros_like(sq_ref)

    xb = x_ref[...]
    not_first, not_last = _row_masks(W, xb.shape[1])
    u1 = _conv13(xb, w1_ref[...], not_first, not_last)
    a1 = jnp.maximum(u1 * sc1_ref[...] + sh1_ref[...], 0.0)           # folded BN1 + ReLU
    u2 = _conv13(a1, w2_ref[...], not_first, not_last)
    sum_ref[...] += jnp.sum(u2, axis=1, keepdims=True)
    sq_ref[...] += jnp.sum(u2 * u2, axis=1, keepdims=True)


def _final_kernel(W, x_ref, w1_ref, sc1_ref, sh1_ref, w2_ref, sc2_ref, sh2_ref, o_ref):
    xb = x_ref[...]
    not_first, not_last = _row_masks(W, xb.shape[1])
    u1 = _conv13(xb, w1_ref[...], not_first, not_last)
    a1 = jnp.maximum(u1 * sc1_ref[...] + sh1_ref[...], 0.0)           # folded BN1 + ReLU
    u2 = _conv13(a1, w2_ref[...], not_first, not_last)
    z2 = u2 * sc2_ref[...] + sh2_ref[...]                             # folded BN2
    # Residual: re-read the x block from VMEM instead of keeping it live across both convs.
    o_ref[...] = jnp.maximum(z2 + x_ref[...], 0.0)


# --------------------------------------------------------------------------------------
# Wrapper: sizing helpers + dispatch
# --------------------------------------------------------------------------------------
def _lcm(a, b):
    return a * b // math.gcd(a, b)


def _vmem_limit_bytes():
    """Generation-aware scoped-VMEM limit: half of physical VMEM, capped at 96 MiB."""
    cap = None
    try:
        cap = int(pltpu.get_tpu_info().vmem_capacity_bytes)
    except Exception:
        cap = None
    if not cap or cap <= 0:
        cap = 64 * 1024 * 1024            # conservative (v7x per-TC physical VMEM)
    return min(96 * 1024 * 1024, cap // 2)


def _choose_l_tile(L, W, C, vmem_limit):
    """Tile of the flattened H*W axis: whole W-rows, lane-dense, VMEM-budget aware.

    Per grid step we hold ~2x double-buffered input block + 2x output block + ~8 live
    (C, L_t) f32 temporaries (taps/u1/a1/u2/masks) -> budget the block at vmem_limit/24
    so the true peak stays well under the scoped limit (v7x hazard from the review).
    """
    live_blocks = 12
    max_bytes = max(vmem_limit // (2 * live_blocks), 256 * 1024)
    max_elems = max(max_bytes // (4 * max(C, 1)), W)
    if L <= max_elems:
        return L

    def best_multiple(unit):
        best, t = None, unit
        while t <= max_elems:
            if L % t == 0:
                best = t
            t += unit
        return best

    t = best_multiple(_lcm(W, 128))       # lane-dense and whole rows
    if t is None:
        t = best_multiple(W)              # whole rows only (respects the budget)
    return t if t is not None else W      # last resort: one W-row per tile


def _flatten_conv_weight(w):
    # PyTorch weight (Cout, Cin, 1, 3) -> (Cout, 3*Cin), column index k*Cin + ci.
    cout, cin = w.shape[0], w.shape[1]
    return jnp.transpose(w[:, :, 0, :], (0, 2, 1)).reshape(cout, 3 * cin)


def residual_apt_forward(x_nchw, p, use_fused=None):
    N, C, H, W = x_nchw.shape
    assert p["w1"].shape == (C, C, 1, 3), "unuse_1x1conv => in_channels == out_channels"
    L = H * W
    vmem_limit = _vmem_limit_bytes()

    x = x_nchw.reshape(N, C, L)           # free reshape (contiguous dims), no transpose
    w1 = _flatten_conv_weight(p["w1"])
    w2 = _flatten_conv_weight(p["w2"])
    g1 = p["g1"].reshape(C, 1)
    bt1 = p["bt1"].reshape(C, 1)
    g2 = p["g2"].reshape(C, 1)
    bt2 = p["bt2"].reshape(C, 1)

    act_bytes = N * C * L * 4
    if use_fused is None:
        use_fused = act_bytes <= min(4 * 1024 * 1024, vmem_limit // 16)

    # ------------------------------------------------------------------ fused fast path
    if use_fused:
        x_spec = pl.BlockSpec((N, C, L), lambda i: (0, 0, 0))
        w_spec = pl.BlockSpec((C, 3 * C), lambda i: (0, 0))
        col_spec = pl.BlockSpec((C, 1), lambda i: (0, 0))
        out = pl.pallas_call(
            functools.partial(_fused_kernel, W, 1.0 / float(N * L)),
            grid=(1,),
            in_specs=[x_spec, w_spec, w_spec, col_spec, col_spec, col_spec, col_spec],
            out_specs=x_spec,
            out_shape=jax.ShapeDtypeStruct((N, C, L), jnp.float32),
            scratch_shapes=[pltpu.VMEM((N, C, L), jnp.float32)],
            compiler_params=pltpu.CompilerParams(
                dimension_semantics=("arbitrary",),
                vmem_limit_bytes=vmem_limit),
        )(x, w1, w2, g1, bt1, g2, bt2)
        return out.reshape(N, C, H, W)

    # ------------------------------------------------------------------ tiled 3-pass path
    L_t = _choose_l_tile(L, W, C, vmem_limit)
    grid = (N, L // L_t)

    x_spec = pl.BlockSpec((None, C, L_t), lambda n, l: (n, 0, l))
    w_spec = pl.BlockSpec((C, 3 * C), lambda n, l: (0, 0))
    col_spec = pl.BlockSpec((C, 1), lambda n, l: (0, 0))
    # Per-n stats partials so v7x megacore can shard the stats passes over n.
    stat_spec = pl.BlockSpec((None, C, 1), lambda n, l: (n, 0, 0))
    stat_shape = jax.ShapeDtypeStruct((N, C, 1), jnp.float32)

    stats_params = pltpu.CompilerParams(
        dimension_semantics=("parallel", "arbitrary"),    # n sharded, l is the reduction
        vmem_limit_bytes=vmem_limit)
    final_params = pltpu.CompilerParams(
        dimension_semantics=("parallel", "parallel"),
        vmem_limit_bytes=vmem_limit)

    cnt = float(N * L)

    def fold_bn(s_part, q_part, gamma, beta):
        s = jnp.sum(s_part, axis=0)                       # (C, 1)
        q = jnp.sum(q_part, axis=0)
        mu = s / cnt
        var = jnp.maximum(q / cnt - mu * mu, 0.0)         # biased (train-mode) variance
        scale = gamma.reshape(C, 1) * lax.rsqrt(var + EPS)
        shift = beta.reshape(C, 1) - mu * scale
        return scale, shift

    # Pass 1: BN1 batch statistics of conv1(x).
    s1, q1 = pl.pallas_call(
        functools.partial(_bn1_stats_kernel, W),
        grid=grid,
        in_specs=[x_spec, w_spec],
        out_specs=[stat_spec, stat_spec],
        out_shape=[stat_shape, stat_shape],
        compiler_params=stats_params,
    )(x, w1)
    sc1, sh1 = fold_bn(s1, q1, p["g1"], p["bt1"])

    # Pass 2: BN2 batch statistics of conv2(relu(bn1(conv1(x)))).
    s2, q2 = pl.pallas_call(
        functools.partial(_bn2_stats_kernel, W),
        grid=grid,
        in_specs=[x_spec, w_spec, col_spec, col_spec, w_spec],
        out_specs=[stat_spec, stat_spec],
        out_shape=[stat_shape, stat_shape],
        compiler_params=stats_params,
    )(x, w1, sc1, sh1, w2)
    sc2, sh2 = fold_bn(s2, q2, p["g2"], p["bt2"])

    # Pass 3: full forward, residual add, ReLU.
    out = pl.pallas_call(
        functools.partial(_final_kernel, W),
        grid=grid,
        in_specs=[x_spec, w_spec, col_spec, col_spec, w_spec, col_spec, col_spec],
        out_specs=x_spec,
        out_shape=jax.ShapeDtypeStruct((N, C, L), jnp.float32),
        compiler_params=final_params,
    )(x, w1, sc1, sh1, w2, sc2, sh2)

    return out.reshape(N, C, H, W)        # free reshape back to NCHW


# --------------------------------------------------------------------------------------
# Params / reference
# --------------------------------------------------------------------------------------
def init_params(key, input_channels, num_channels):
    ks = jax.random.split(key, 8)
    f32 = jnp.float32
    return dict(
        w1=0.3 * jax.random.normal(ks[0], (num_channels, input_channels, 1, 3), f32),
        b1=0.1 * jax.random.normal(ks[1], (num_channels,), f32),
        g1=1.0 + 0.1 * jax.random.normal(ks[2], (num_channels,), f32),
        bt1=0.1 * jax.random.normal(ks[3], (num_channels,), f32),
        w2=0.3 * jax.random.normal(ks[4], (num_channels, num_channels, 1, 3), f32),
        b2=0.1 * jax.random.normal(ks[5], (num_channels,), f32),
        g2=1.0 + 0.1 * jax.random.normal(ks[6], (num_channels,), f32),
        bt2=0.1 * jax.random.normal(ks[7], (num_channels,), f32),
    )


def reference_forward(x, p):
    # Pure-JAX reference matching the PyTorch forward (train-mode BN, biases included).
    def conv(x, w, b):
        y = lax.conv_general_dilated(
            x, w, window_strides=(1, 1), padding=((0, 0), (1, 1)),
            dimension_numbers=("NCHW", "OIHW", "NCHW"),
            precision=lax.Precision.HIGHEST)
        return y + b[None, :, None, None]

    def bn(y, g, bt):
        mu = jnp.mean(y, axis=(0, 2, 3), keepdims=True)
        var = jnp.mean((y - mu) ** 2, axis=(0, 2, 3), keepdims=True)
        return (y - mu) / jnp.sqrt(var + EPS) * g[None, :, None, None] + bt[None, :, None, None]

    y = jax.nn.relu(bn(conv(x, p["w1"], p["b1"]), p["g1"], p["bt1"]))
    y = bn(conv(y, p["w2"], p["b2"]), p["g2"], p["bt2"])
    return jax.nn.relu(y + x)


if __name__ == "__main__":
    key = jax.random.PRNGKey(0)
    kx, kp = jax.random.split(key)
    N, C, H, W = 2, 4, 16, 16             # input_channels == num_channels (no 1x1 conv)
    x = jax.random.normal(kx, (N, C, H, W), jnp.float32)
    params = init_params(kp, C, C)

    ref = jax.block_until_ready(reference_forward(x, params))

    out_fused = jax.block_until_ready(residual_apt_forward(x, params))                 # fused fast path
    out_grid = jax.block_until_ready(residual_apt_forward(x, params, use_fused=False))  # tiled 3-pass path

    for name, out in (("fused", out_fused), ("grid", out_grid)):
        assert out.shape == (N, C, H, W), (name, out.shape)
        if not np.allclose(np.asarray(out), np.asarray(ref), atol=1e-4, rtol=1e-4):
            err = float(np.max(np.abs(np.asarray(out) - np.asarray(ref))))
            raise AssertionError(f"Pallas kernel ({name} path) mismatch vs reference, max abs err = {err}")
    print("KERNEL_OK")
</pallas_src>

<mosaic_0001>
module attributes {stable_mosaic.version = 11 : i64} {
  func.func @_fused_kernel(%arg0: i32, %arg1: memref<2x4x256xf32, #tpu.memory_space<vmem>>, %arg2: memref<4x12xf32, #tpu.memory_space<vmem>>, %arg3: memref<4x12xf32, #tpu.memory_space<vmem>>, %arg4: memref<4x1xf32, #tpu.memory_space<vmem>>, %arg5: memref<4x1xf32, #tpu.memory_space<vmem>>, %arg6: memref<4x1xf32, #tpu.memory_space<vmem>>, %arg7: memref<4x1xf32, #tpu.memory_space<vmem>>, %arg8: memref<2x4x256xf32, #tpu.memory_space<vmem>>, %arg9: memref<2x4x256xf32, #tpu.memory_space<vmem>>) attributes {dimension_semantics = [#tpu.dimension_semantics<arbitrary>], iteration_bounds = array<i64: 1>, scalar_prefetch = 0 : i64, scratch_operands = 1 : i64, tpu.core_type = #tpu.core_type<tc>, window_params = [{pipeline_mode = #tpu.pipeline_mode<synchronous>, transform_indices = @transform_0, window_bounds = array<i64: 2, 4, 256>}, {pipeline_mode = #tpu.pipeline_mode<synchronous>, transform_indices = @transform_1, window_bounds = array<i64: 4, 12>}, {pipeline_mode = #tpu.pipeline_mode<synchronous>, transform_indices = @transform_2, window_bounds = array<i64: 4, 12>}, {pipeline_mode = #tpu.pipeline_mode<synchronous>, transform_indices = @transform_3, window_bounds = array<i64: 4, 1>}, {pipeline_mode = #tpu.pipeline_mode<synchronous>, transform_indices = @transform_4, window_bounds = array<i64: 4, 1>}, {pipeline_mode = #tpu.pipeline_mode<synchronous>, transform_indices = @transform_5, window_bounds = array<i64: 4, 1>}, {pipeline_mode = #tpu.pipeline_mode<synchronous>, transform_indices = @transform_6, window_bounds = array<i64: 4, 1>}, {pipeline_mode = #tpu.pipeline_mode<synchronous>, transform_indices = @transform_7, window_bounds = array<i64: 2, 4, 256>}]} {
    %0 = tpu.iota {dimensions = array<i32: 1>} : vector<1x256xi32>
    %c16_i32 = arith.constant 16 : i32
    %c0_i32 = arith.constant 0 : i32
    %1 = arith.cmpi eq, %c16_i32, %c0_i32 : i32
    %c1_i32 = arith.constant 1 : i32
    %2 = arith.select %1, %c1_i32, %c16_i32 : i32
    %3 = vector.broadcast %2 : i32 to vector<1x256xi32>
    %4 = arith.remsi %0, %3 : vector<1x256xi32>
    %c0_i32_0 = arith.constant 0 : i32
    %5 = vector.broadcast %c0_i32_0 : i32 to vector<1x256xi32>
    %6 = arith.cmpi ne, %4, %5 : vector<1x256xi32>
    %c0_i32_1 = arith.constant 0 : i32
    %7 = vector.broadcast %c0_i32_1 : i32 to vector<1x256xi32>
    %8 = arith.cmpi slt, %4, %7 : vector<1x256xi32>
    %c0_i32_2 = arith.constant 0 : i32
    %9 = arith.cmpi slt, %2, %c0_i32_2 : i32
    %10 = vector.broadcast %9 : i1 to vector<1x256xi1>
    %11 = vector.broadcast %10 : vector<1x256xi1> to vector<1x256xi1>
    %12 = arith.xori %8, %11 : vector<1x256xi1>
    %13 = arith.andi %12, %6 : vector<1x256xi1>
    %14 = vector.broadcast %2 : i32 to vector<1x256xi32>
    %15 = arith.addi %4, %14 : vector<1x256xi32>
    %16 = arith.select %13, %15, %4 : vector<1x256xi1>, vector<1x256xi32>
    %c0_i32_3 = arith.constant 0 : i32
    %17 = vector.broadcast %c0_i32_3 : i32 to vector<1x256xi32>
    %18 = arith.cmpi ne, %16, %17 : vector<1x256xi32>
    %c15_i32 = arith.constant 15 : i32
    %19 = vector.broadcast %c15_i32 : i32 to vector<1x256xi32>
    %20 = arith.cmpi ne, %16, %19 : vector<1x256xi32>
    %cst = arith.constant 0.000000e+00 : f32
    %21 = vector.broadcast %cst : f32 to vector<4x1xf32>
    %cst_4 = arith.constant 0.000000e+00 : f32
    %22 = vector.broadcast %cst_4 : f32 to vector<4x1xf32>
    %c0 = arith.constant 0 : index
    %c0_5 = arith.constant 0 : index
    %c0_6 = arith.constant 0 : index
    %23 = vector.load %arg1[%c0, %c0_5, %c0_6] : memref<2x4x256xf32, #tpu.memory_space<vmem>>, vector<1x4x256xf32>
    %24 = vector.shape_cast %23 : vector<1x4x256xf32> to vector<4x256xf32>
    %c0_7 = arith.constant 0 : index
    %c0_8 = arith.constant 0 : index
    %25 = vector.load %arg2[%c0_7, %c0_8] : memref<4x12xf32, #tpu.memory_space<vmem>>, vector<4x12xf32>
    %c1_i32_9 = arith.constant 1 : i32
    %26 = tpu.dynamic_rotate %24 by %c1_i32_9 dim 1 : vector<4x256xf32>, i32 -> vector<4x256xf32>
    %cst_10 = arith.constant 0.000000e+00 : f32
    %27 = vector.shape_cast %18 : vector<1x256xi1> to vector<1x256xi1>
    %28 = vector.broadcast %27 : vector<1x256xi1> to vector<4x256xi1>
    %29 = vector.broadcast %cst_10 : f32 to vector<4x256xf32>
    %30 = arith.select %28, %26, %29 : vector<4x256xi1>, vector<4x256xf32>
    %31 = vector.extract_strided_slice %25 {offsets = [0, 0], sizes = [4, 1], strides = [1, 1]} : vector<4x12xf32> to vector<4x1xf32>
    %32 = vector.extract_strided_slice %30 {offsets = [0, 0], sizes = [1, 256], strides = [1, 1]} : vector<4x256xf32> to vector<1x256xf32>
    %33 = vector.broadcast %31 : vector<4x1xf32> to vector<4x256xf32>
    %34 = vector.broadcast %32 : vector<1x256xf32> to vector<4x256xf32>
    %35 = arith.mulf %33, %34 : vector<4x256xf32>
    %36 = vector.extract_strided_slice %25 {offsets = [0, 1], sizes = [4, 1], strides = [1, 1]} : vector<4x12xf32> to vector<4x1xf32>
    %37 = vector.extract_strided_slice %30 {offsets = [1, 0], sizes = [1, 256], strides = [1, 1]} : vector<4x256xf32> to vector<1x256xf32>
    %38 = vector.broadcast %36 : vector<4x1xf32> to vector<4x256xf32>
    %39 = vector.broadcast %37 : vector<1x256xf32> to vector<4x256xf32>
    %40 = arith.mulf %38, %39 : vector<4x256xf32>
    %41 = arith.addf %35, %40 : vector<4x256xf32>
    %42 = vector.extract_strided_slice %25 {offsets = [0, 2], sizes = [4, 1], strides = [1, 1]} : vector<4x12xf32> to vector<4x1xf32>
    %43 = vector.extract_strided_slice %30 {offsets = [2, 0], sizes = [1, 256], strides = [1, 1]} : vector<4x256xf32> to vector<1x256xf32>
    %44 = vector.broadcast %42 : vector<4x1xf32> to vector<4x256xf32>
    %45 = vector.broadcast %43 : vector<1x256xf32> to vector<4x256xf32>
    %46 = arith.mulf %44, %45 : vector<4x256xf32>
    %47 = arith.addf %41, %46 : vector<4x256xf32>
    %48 = vector.extract_strided_slice %25 {offsets = [0, 3], sizes = [4, 1], strides = [1, 1]} : vector<4x12xf32> to vector<4x1xf32>
    %49 = vector.extract_strided_slice %30 {offsets = [3, 0], sizes = [1, 256], strides = [1, 1]} : vector<4x256xf32> to vector<1x256xf32>
    %50 = vector.broadcast %48 : vector<4x1xf32> to vector<4x256xf32>
    %51 = vector.broadcast %49 : vector<1x256xf32> to vector<4x256xf32>
    %52 = arith.mulf %50, %51 : vector<4x256xf32>
    %53 = arith.addf %47, %52 : vector<4x256xf32>
    %54 = vector.extract_strided_slice %25 {offsets = [0, 4], sizes = [4, 1], strides = [1, 1]} : vector<4x12xf32> to vector<4x1xf32>
    %55 = vector.extract_strided_slice %24 {offsets = [0, 0], sizes = [1, 256], strides = [1, 1]} : vector<4x256xf32> to vector<1x256xf32>
    %56 = vector.broadcast %54 : vector<4x1xf32> to vector<4x256xf32>
    %57 = vector.broadcast %55 : vector<1x256xf32> to vector<4x256xf32>
    %58 = arith.mulf %56, %57 : vector<4x256xf32>
    %59 = arith.addf %53, %58 : vector<4x256xf32>
    %60 = vector.extract_strided_slice %25 {offsets = [0, 5], sizes = [4, 1], strides = [1, 1]} : vector<4x12xf32> to vector<4x1xf32>
    %61 = vector.extract_strided_slice %24 {offsets = [1, 0], sizes = [1, 256], strides = [1, 1]} : vector<4x256xf32> to vector<1x256xf32>
    %62 = vector.broadcast %60 : vector<4x1xf32> to vector<4x256xf32>
    %63 = vector.broadcast %61 : vector<1x256xf32> to vector<4x256xf32>
    %64 = arith.mulf %62, %63 : vector<4x256xf32>
    %65 = arith.addf %59, %64 : vector<4x256xf32>
    %66 = vector.extract_strided_slice %25 {offsets = [0, 6], sizes = [4, 1], strides = [1, 1]} : vector<4x12xf32> to vector<4x1xf32>
    %67 = vector.extract_strided_slice %24 {offsets = [2, 0], sizes = [1, 256], strides = [1, 1]} : vector<4x256xf32> to vector<1x256xf32>
    %68 = vector.broadcast %66 : vector<4x1xf32> to vector<4x256xf32>
    %69 = vector.broadcast %67 : vector<1x256xf32> to vector<4x256xf32>
    %70 = arith.mulf %68, %69 : vector<4x256xf32>
    %71 = arith.addf %65, %70 : vector<4x256xf32>
    %72 = vector.extract_strided_slice %25 {offsets = [0, 7], sizes = [4, 1], strides = [1, 1]} : vector<4x12xf32> to vector<4x1xf32>
    %73 = vector.extract_strided_slice %24 {offsets = [3, 0], sizes = [1, 256], strides = [1, 1]} : vector<4x256xf32> to vector<1x256xf32>
    %74 = vector.broadcast %72 : vector<4x1xf32> to vector<4x256xf32>
    %75 = vector.broadcast %73 : vector<1x256xf32> to vector<4x256xf32>
    %76 = arith.mulf %74, %75 : vector<4x256xf32>
    %77 = arith.addf %71, %76 : vector<4x256xf32>
    %c255_i32 = arith.constant 255 : i32
    %78 = tpu.dynamic_rotate %24 by %c255_i32 dim 1 : vector<4x256xf32>, i32 -> vector<4x256xf32>
    %cst_11 = arith.constant 0.000000e+00 : f32
    %79 = vector.shape_cast %20 : vector<1x256xi1> to vector<1x256xi1>
    %80 = vector.broadcast %79 : vector<1x256xi1> to vector<4x256xi1>
    %81 = vector.broadcast %cst_11 : f32 to vector<4x256xf32>
    %82 = arith.select %80, %78, %81 : vector<4x256xi1>, vector<4x256xf32>
    %83 = vector.extract_strided_slice %25 {offsets = [0, 8], sizes = [4, 1], strides = [1, 1]} : vector<4x12xf32> to vector<4x1xf32>
    %84 = vector.extract_strided_slice %82 {offsets = [0, 0], sizes = [1, 256], strides = [1, 1]} : vector<4x256xf32> to vector<1x256xf32>
    %85 = vector.broadcast %83 : vector<4x1xf32> to vector<4x256xf32>
    %86 = vector.broadcast %84 : vector<1x256xf32> to vector<4x256xf32>
    %87 = arith.mulf %85, %86 : vector<4x256xf32>
    %88 = arith.addf %77, %87 : vector<4x256xf32>
    %89 = vector.extract_strided_slice %25 {offsets = [0, 9], sizes = [4, 1], strides = [1, 1]} : vector<4x12xf32> to vector<4x1xf32>
    %90 = vector.extract_strided_slice %82 {offsets = [1, 0], sizes = [1, 256], strides = [1, 1]} : vector<4x256xf32> to vector<1x256xf32>
    %91 = vector.broadcast %89 : vector<4x1xf32> to vector<4x256xf32>
    %92 = vector.broadcast %90 : vector<1x256xf32> to vector<4x256xf32>
    %93 = arith.mulf %91, %92 : vector<4x256xf32>
    %94 = arith.addf %88, %93 : vector<4x256xf32>
    %95 = vector.extract_strided_slice %25 {offsets = [0, 10], sizes = [4, 1], strides = [1, 1]} : vector<4x12xf32> to vector<4x1xf32>
    %96 = vector.extract_strided_slice %82 {offsets = [2, 0], sizes = [1, 256], strides = [1, 1]} : vector<4x256xf32> to vector<1x256xf32>
    %97 = vector.broadcast %95 : vector<4x1xf32> to vector<4x256xf32>
    %98 = vector.broadcast %96 : vector<1x256xf32> to vector<4x256xf32>
    %99 = arith.mulf %97, %98 : vector<4x256xf32>
    %100 = arith.addf %94, %99 : vector<4x256xf32>
    %101 = vector.extract_strided_slice %25 {offsets = [0, 11], sizes = [4, 1], strides = [1, 1]} : vector<4x12xf32> to vector<4x1xf32>
    %102 = vector.extract_strided_slice %82 {offsets = [3, 0], sizes = [1, 256], strides = [1, 1]} : vector<4x256xf32> to vector<1x256xf32>
    %103 = vector.broadcast %101 : vector<4x1xf32> to vector<4x256xf32>
    %104 = vector.broadcast %102 : vector<1x256xf32> to vector<4x256xf32>
    %105 = arith.mulf %103, %104 : vector<4x256xf32>
    %106 = arith.addf %100, %105 : vector<4x256xf32>
    %c0_12 = arith.constant 0 : index
    %c0_13 = arith.constant 0 : index
    %c0_14 = arith.constant 0 : index
    %107 = vector.load %arg9[%c0_12, %c0_13, %c0_14] : memref<2x4x256xf32, #tpu.memory_space<vmem>>, vector<1x4x256xf32>
    %108 = vector.shape_cast %107 : vector<1x4x256xf32> to vector<4x256xf32>
    %109 = vector.shape_cast %106 : vector<4x256xf32> to vector<1x4x256xf32>
    tpu.vector_store %arg9[%c0_12, %c0_13, %c0_14], %109 {strides = array<i32>} : memref<2x4x256xf32, #tpu.memory_space<vmem>>, vector<1x4x256xf32>,
    %cst_15 = arith.constant dense<0.000000e+00> : vector<4xf32>
    %110 = vector.multi_reduction <add>, %106, %cst_15 [1] : vector<4x256xf32> to vector<4xf32>
    %111 = vector.shape_cast %110 : vector<4xf32> to vector<4x1xf32>
    %112 = arith.addf %21, %111 : vector<4x1xf32>
    %113 = arith.mulf %106, %106 : vector<4x256xf32>
    %cst_16 = arith.constant dense<0.000000e+00> : vector<4xf32>
    %114 = vector.multi_reduction <add>, %113, %cst_16 [1] : vector<4x256xf32> to vector<4xf32>
    %115 = vector.shape_cast %114 : vector<4xf32> to vector<4x1xf32>
    %116 = arith.addf %22, %115 : vector<4x1xf32>
    %c1 = arith.constant 1 : index
    %c0_17 = arith.constant 0 : index
    %c0_18 = arith.constant 0 : index
    %117 = vector.load %arg1[%c1, %c0_17, %c0_18] : memref<2x4x256xf32, #tpu.memory_space<vmem>>, vector<1x4x256xf32>
    %118 = vector.shape_cast %117 : vector<1x4x256xf32> to vector<4x256xf32>
    %c0_19 = arith.constant 0 : index
    %c0_20 = arith.constant 0 : index
    %119 = vector.load %arg2[%c0_19, %c0_20] : memref<4x12xf32, #tpu.memory_space<vmem>>, vector<4x12xf32>
    %c1_i32_21 = arith.constant 1 : i32
    %120 = tpu.dynamic_rotate %118 by %c1_i32_21 dim 1 : vector<4x256xf32>, i32 -> vector<4x256xf32>
    %cst_22 = arith.constant 0.000000e+00 : f32
    %121 = vector.shape_cast %18 : vector<1x256xi1> to vector<1x256xi1>
    %122 = vector.broadcast %121 : vector<1x256xi1> to vector<4x256xi1>
    %123 = vector.broadcast %cst_22 : f32 to vector<4x256xf32>
    %124 = arith.select %122, %120, %123 : vector<4x256xi1>, vector<4x256xf32>
    %125 = vector.extract_strided_slice %119 {offsets = [0, 0], sizes = [4, 1], strides = [1, 1]} : vector<4x12xf32> to vector<4x1xf32>
    %126 = vector.extract_strided_slice %124 {offsets = [0, 0], sizes = [1, 256], strides = [1, 1]} : vector<4x256xf32> to vector<1x256xf32>
    %127 = vector.broadcast %125 : vector<4x1xf32> to vector<4x256xf32>
    %128 = vector.broadcast %126 : vector<1x256xf32> to vector<4x256xf32>
    %129 = arith.mulf %127, %128 : vector<4x256xf32>
    %130 = vector.extract_strided_slice %119 {offsets = [0, 1], sizes = [4, 1], strides = [1, 1]} : vector<4x12xf32> to vector<4x1xf32>
    %131 = vector.extract_strided_slice %124 {offsets = [1, 0], sizes = [1, 256], strides = [1, 1]} : vector<4x256xf32> to vector<1x256xf32>
    %132 = vector.broadcast %130 : vector<4x1xf32> to vector<4x256xf32>
    %133 = vector.broadcast %131 : vector<1x256xf32> to vector<4x256xf32>
    %134 = arith.mulf %132, %133 : vector<4x256xf32>
    %135 = arith.addf %129, %134 : vector<4x256xf32>
    %136 = vector.extract_strided_slice %119 {offsets = [0, 2], sizes = [4, 1], strides = [1, 1]} : vector<4x12xf32> to vector<4x1xf32>
    %137 = vector.extract_strided_slice %124 {offsets = [2, 0], sizes = [1, 256], strides = [1, 1]} : vector<4x256xf32> to vector<1x256xf32>
    %138 = vector.broadcast %136 : vector<4x1xf32> to vector<4x256xf32>
    %139 = vector.broadcast %137 : vector<1x256xf32> to vector<4x256xf32>
    %140 = arith.mulf %138, %139 : vector<4x256xf32>
    %141 = arith.addf %135, %140 : vector<4x256xf32>
    %142 = vector.extract_strided_slice %119 {offsets = [0, 3], sizes = [4, 1], strides = [1, 1]} : vector<4x12xf32> to vector<4x1xf32>
    %143 = vector.extract_strided_slice %124 {offsets = [3, 0], sizes = [1, 256], strides = [1, 1]} : vector<4x256xf32> to vector<1x256xf32>
    %144 = vector.broadcast %142 : vector<4x1xf32> to vector<4x256xf32>
    %145 = vector.broadcast %143 : vector<1x256xf32> to vector<4x256xf32>
    %146 = arith.mulf %144, %145 : vector<4x256xf32>
    %147 = arith.addf %141, %146 : vector<4x256xf32>
    %148 = vector.extract_strided_slice %119 {offsets = [0, 4], sizes = [4, 1], strides = [1, 1]} : vector<4x12xf32> to vector<4x1xf32>
    %149 = vector.extract_strided_slice %118 {offsets = [0, 0], sizes = [1, 256], strides = [1, 1]} : vector<4x256xf32> to vector<1x256xf32>
    %150 = vector.broadcast %148 : vector<4x1xf32> to vector<4x256xf32>
    %151 = vector.broadcast %149 : vector<1x256xf32> to vector<4x256xf32>
    %152 = arith.mulf %150, %151 : vector<4x256xf32>
    %153 = arith.addf %147, %152 : vector<4x256xf32>
    %154 = vector.extract_strided_slice %119 {offsets = [0, 5], sizes = [4, 1], strides = [1, 1]} : vector<4x12xf32> to vector<4x1xf32>
    %155 = vector.extract_strided_slice %118 {offsets = [1, 0], sizes = [1, 256], strides = [1, 1]} : vector<4x256xf32> to vector<1x256xf32>
    %156 = vector.broadcast %154 : vector<4x1xf32> to vector<4x256xf32>
    %157 = vector.broadcast %155 : vector<1x256xf32> to vector<4x256xf32>
    %158 = arith.mulf %156, %157 : vector<4x256xf32>
    %159 = arith.addf %153, %158 : vector<4x256xf32>
    %160 = vector.extract_strided_slice %119 {offsets = [0, 6], sizes = [4, 1], strides = [1, 1]} : vector<4x12xf32> to vector<4x1xf32>
    %161 = vector.extract_strided_slice %118 {offsets = [2, 0], sizes = [1, 256], strides = [1, 1]} : vector<4x256xf32> to vector<1x256xf32>
    %162 = vector.broadcast %160 : vector<4x1xf32> to vector<4x256xf32>
    %163 = vector.broadcast %161 : vector<1x256xf32> to vector<4x256xf32>
    %164 = arith.mulf %162, %163 : vector<4x256xf32>
    %165 = arith.addf %159, %164 : vector<4x256xf32>
    %166 = vector.extract_strided_slice %119 {offsets = [0, 7], sizes = [4, 1], strides = [1, 1]} : vector<4x12xf32> to vector<4x1xf32>
    %167 = vector.extract_strided_slice %118 {offsets = [3, 0], sizes = [1, 256], strides = [1, 1]} : vector<4x256xf32> to vector<1x256xf32>
    %168 = vector.broadcast %166 : vector<4x1xf32> to vector<4x256xf32>
    %169 = vector.broadcast %167 : vector<1x256xf32> to vector<4x256xf32>
    %170 = arith.mulf %168, %169 : vector<4x256xf32>
    %171 = arith.addf %165, %170 : vector<4x256xf32>
    %c255_i32_23 = arith.constant 255 : i32
    %172 = tpu.dynamic_rotate %118 by %c255_i32_23 dim 1 : vector<4x256xf32>, i32 -> vector<4x256xf32>
    %cst_24 = arith.constant 0.000000e+00 : f32
    %173 = vector.shape_cast %20 : vector<1x256xi1> to vector<1x256xi1>
    %174 = vector.broadcast %173 : vector<1x256xi1> to vector<4x256xi1>
    %175 = vector.broadcast %cst_24 : f32 to vector<4x256xf32>
    %176 = arith.select %174, %172, %175 : vector<4x256xi1>, vector<4x256xf32>
    %177 = vector.extract_strided_slice %119 {offsets = [0, 8], sizes = [4, 1], strides = [1, 1]} : vector<4x12xf32> to vector<4x1xf32>
    %178 = vector.extract_strided_slice %176 {offsets = [0, 0], sizes = [1, 256], strides = [1, 1]} : vector<4x256xf32> to vector<1x256xf32>
    %179 = vector.broadcast %177 : vector<4x1xf32> to vector<4x256xf32>
    %180 = vector.broadcast %178 : vector<1x256xf32> to vector<4x256xf32>
    %181 = arith.mulf %179, %180 : vector<4x256xf32>
    %182 = arith.addf %171, %181 : vector<4x256xf32>
    %183 = vector.extract_strided_slice %119 {offsets = [0, 9], sizes = [4, 1], strides = [1, 1]} : vector<4x12xf32> to vector<4x1xf32>
    %184 = vector.extract_strided_slice %176 {offsets = [1, 0], sizes = [1, 256], strides = [1, 1]} : vector<4x256xf32> to vector<1x256xf32>
    %185 = vector.broadcast %183 : vector<4x1xf32> to vector<4x256xf32>
    %186 = vector.broadcast %184 : vector<1x256xf32> to vector<4x256xf32>
    %187 = arith.mulf %185, %186 : vector<4x256xf32>
    %188 = arith.addf %182, %187 : vector<4x256xf32>
    %189 = vector.extract_strided_slice %119 {offsets = [0, 10], sizes = [4, 1], strides = [1, 1]} : vector<4x12xf32> to vector<4x1xf32>
    %190 = vector.extract_strided_slice %176 {offsets = [2, 0], sizes = [1, 256], strides = [1, 1]} : vector<4x256xf32> to vector<1x256xf32>
    %191 = vector.broadcast %189 : vector<4x1xf32> to vector<4x256xf32>
    %192 = vector.broadcast %190 : vector<1x256xf32> to vector<4x256xf32>
    %193 = arith.mulf %191, %192 : vector<4x256xf32>
    %194 = arith.addf %188, %193 : vector<4x256xf32>
    %195 = vector.extract_strided_slice %119 {offsets = [0, 11], sizes = [4, 1], strides = [1, 1]} : vector<4x12xf32> to vector<4x1xf32>
    %196 = vector.extract_strided_slice %176 {offsets = [3, 0], sizes = [1, 256], strides = [1, 1]} : vector<4x256xf32> to vector<1x256xf32>
    %197 = vector.broadcast %195 : vector<4x1xf32> to vector<4x256xf32>
    %198 = vector.broadcast %196 : vector<1x256xf32> to vector<4x256xf32>
    %199 = arith.mulf %197, %198 : vector<4x256xf32>
    %200 = arith.addf %194, %199 : vector<4x256xf32>
    %c1_25 = arith.constant 1 : index
    %c0_26 = arith.constant 0 : index
    %c0_27 = arith.constant 0 : index
    %201 = vector.load %arg9[%c1_25, %c0_26, %c0_27] : memref<2x4x256xf32, #tpu.memory_space<vmem>>, vector<1x4x256xf32>
    %202 = vector.shape_cast %201 : vector<1x4x256xf32> to vector<4x256xf32>
    %203 = vector.shape_cast %200 : vector<4x256xf32> to vector<1x4x256xf32>
    tpu.vector_store %arg9[%c1_25, %c0_26, %c0_27], %203 {strides = array<i32>} : memref<2x4x256xf32, #tpu.memory_space<vmem>>, vector<1x4x256xf32>,
    %cst_28 = arith.constant dense<0.000000e+00> : vector<4xf32>
    %204 = vector.multi_reduction <add>, %200, %cst_28 [1] : vector<4x256xf32> to vector<4xf32>
    %205 = vector.shape_cast %204 : vector<4xf32> to vector<4x1xf32>
    %206 = arith.addf %112, %205 : vector<4x1xf32>
    %207 = arith.mulf %200, %200 : vector<4x256xf32>
    %cst_29 = arith.constant dense<0.000000e+00> : vector<4xf32>
    %208 = vector.multi_reduction <add>, %207, %cst_29 [1] : vector<4x256xf32> to vector<4xf32>
    %209 = vector.shape_cast %208 : vector<4xf32> to vector<4x1xf32>
    %210 = arith.addf %116, %209 : vector<4x1xf32>
    %cst_30 = arith.constant 0.001953125 : f32
    %211 = vector.broadcast %cst_30 : f32 to vector<4x1xf32>
    %212 = arith.mulf %206, %211 : vector<4x1xf32>
    %cst_31 = arith.constant 0.001953125 : f32
    %213 = vector.broadcast %cst_31 : f32 to vector<4x1xf32>
    %214 = arith.mulf %210, %213 : vector<4x1xf32>
    %215 = arith.mulf %212, %212 : vector<4x1xf32>
    %216 = arith.subf %214, %215 : vector<4x1xf32>
    %cst_32 = arith.constant 0.000000e+00 : f32
    %217 = vector.broadcast %cst_32 : f32 to vector<4x1xf32>
    %218 = arith.maximumf %216, %217 : vector<4x1xf32>
    %c0_33 = arith.constant 0 : index
    %c0_34 = arith.constant 0 : index
    %219 = vector.load %arg4[%c0_33, %c0_34] : memref<4x1xf32, #tpu.memory_space<vmem>>, vector<4x1xf32>
    %cst_35 = arith.constant 9.99999974E-6 : f32
    %220 = vector.broadcast %cst_35 : f32 to vector<4x1xf32>
    %221 = arith.addf %218, %220 : vector<4x1xf32>
    %222 = math.rsqrt %221 : vector<4x1xf32>
    %223 = arith.mulf %219, %222 : vector<4x1xf32>
    %c0_36 = arith.constant 0 : index
    %c0_37 = arith.constant 0 : index
    %224 = vector.load %arg5[%c0_36, %c0_37] : memref<4x1xf32, #tpu.memory_space<vmem>>, vector<4x1xf32>
    %225 = arith.mulf %212, %223 : vector<4x1xf32>
    %226 = arith.subf %224, %225 : vector<4x1xf32>
    %cst_38 = arith.constant 0.000000e+00 : f32
    %227 = vector.broadcast %cst_38 : f32 to vector<4x1xf32>
    %cst_39 = arith.constant 0.000000e+00 : f32
    %228 = vector.broadcast %cst_39 : f32 to vector<4x1xf32>
    %c0_40 = arith.constant 0 : index
    %c0_41 = arith.constant 0 : index
    %c0_42 = arith.constant 0 : index
    %229 = vector.load %arg9[%c0_40, %c0_41, %c0_42] : memref<2x4x256xf32, #tpu.memory_space<vmem>>, vector<1x4x256xf32>
    %230 = vector.shape_cast %229 : vector<1x4x256xf32> to vector<4x256xf32>
    %231 = vector.broadcast %223 : vector<4x1xf32> to vector<4x256xf32>
    %232 = arith.mulf %230, %231 : vector<4x256xf32>
    %233 = vector.broadcast %226 : vector<4x1xf32> to vector<4x256xf32>
    %234 = arith.addf %232, %233 : vector<4x256xf32>
    %cst_43 = arith.constant 0.000000e+00 : f32
    %235 = vector.broadcast %cst_43 : f32 to vector<4x256xf32>
    %236 = arith.maximumf %234, %235 : vector<4x256xf32>
    %c0_44 = arith.constant 0 : index
    %c0_45 = arith.constant 0 : index
    %237 = vector.load %arg3[%c0_44, %c0_45] : memref<4x12xf32, #tpu.memory_space<vmem>>, vector<4x12xf32>
    %c1_i32_46 = arith.constant 1 : i32
    %238 = tpu.dynamic_rotate %236 by %c1_i32_46 dim 1 : vector<4x256xf32>, i32 -> vector<4x256xf32>
    %cst_47 = arith.constant 0.000000e+00 : f32
    %239 = vector.shape_cast %18 : vector<1x256xi1> to vector<1x256xi1>
    %240 = vector.broadcast %239 : vector<1x256xi1> to vector<4x256xi1>
    %241 = vector.broadcast %cst_47 : f32 to vector<4x256xf32>
    %242 = arith.select %240, %238, %241 : vector<4x256xi1>, vector<4x256xf32>
    %243 = vector.extract_strided_slice %237 {offsets = [0, 0], sizes = [4, 1], strides = [1, 1]} : vector<4x12xf32> to vector<4x1xf32>
    %244 = vector.extract_strided_slice %242 {offsets = [0, 0], sizes = [1, 256], strides = [1, 1]} : vector<4x256xf32> to vector<1x256xf32>
    %245 = vector.broadcast %243 : vector<4x1xf32> to vector<4x256xf32>
    %246 = vector.broadcast %244 : vector<1x256xf32> to vector<4x256xf32>
    %247 = arith.mulf %245, %246 : vector<4x256xf32>
    %248 = vector.extract_strided_slice %237 {offsets = [0, 1], sizes = [4, 1], strides = [1, 1]} : vector<4x12xf32> to vector<4x1xf32>
    %249 = vector.extract_strided_slice %242 {offsets = [1, 0], sizes = [1, 256], strides = [1, 1]} : vector<4x256xf32> to vector<1x256xf32>
    %250 = vector.broadcast %248 : vector<4x1xf32> to vector<4x256xf32>
    %251 = vector.broadcast %249 : vector<1x256xf32> to vector<4x256xf32>
    %252 = arith.mulf %250, %251 : vector<4x256xf32>
    %253 = arith.addf %247, %252 : vector<4x256xf32>
    %254 = vector.extract_strided_slice %237 {offsets = [0, 2], sizes = [4, 1], strides = [1, 1]} : vector<4x12xf32> to vector<4x1xf32>
    %255 = vector.extract_strided_slice %242 {offsets = [2, 0], sizes = [1, 256], strides = [1, 1]} : vector<4x256xf32> to vector<1x256xf32>
    %256 = vector.broadcast %254 : vector<4x1xf32> to vector<4x256xf32>
    %257 = vector.broadcast %255 : vector<1x256xf32> to vector<4x256xf32>
    %258 = arith.mulf %256, %257 : vector<4x256xf32>
    %259 = arith.addf %253, %258 : vector<4x256xf32>
    %260 = vector.extract_strided_slice %237 {offsets = [0, 3], sizes = [4, 1], strides = [1, 1]} : vector<4x12xf32> to vector<4x1xf32>
    %261 = vector.extract_strided_slice %242 {offsets = [3, 0], sizes = [1, 256], strides = [1, 1]} : vector<4x256xf32> to vector<1x256xf32>
    %262 = vector.broadcast %260 : vector<4x1xf32> to vector<4x256xf32>
    %263 = vector.broadcast %261 : vector<1x256xf32> to vector<4x256xf32>
    %264 = arith.mulf %262, %263 : vector<4x256xf32>
    %265 = arith.addf %259, %264 : vector<4x256xf32>
    %266 = vector.extract_strided_slice %237 {offsets = [0, 4], sizes = [4, 1], strides = [1, 1]} : vector<4x12xf32> to vector<4x1xf32>
    %267 = vector.extract_strided_slice %236 {offsets = [0, 0], sizes = [1, 256], strides = [1, 1]} : vector<4x256xf32> to vector<1x256xf32>
    %268 = vector.broadcast %266 : vector<4x1xf32> to vector<4x256xf32>
    %269 = vector.broadcast %267 : vector<1x256xf32> to vector<4x256xf32>
    %270 = arith.mulf %268, %269 : vector<4x256xf32>
    %271 = arith.addf %265, %270 : vector<4x256xf32>
    %272 = vector.extract_strided_slice %237 {offsets = [0, 5], sizes = [4, 1], strides = [1, 1]} : vector<4x12xf32> to vector<4x1xf32>
    %273 = vector.extract_strided_slice %236 {offsets = [1, 0], sizes = [1, 256], strides = [1, 1]} : vector<4x256xf32> to vector<1x256xf32>
    %274 = vector.broadcast %272 : vector<4x1xf32> to vector<4x256xf32>
    %275 = vector.broadcast %273 : vector<1x256xf32> to vector<4x256xf32>
    %276 = arith.mulf %274, %275 : vector<4x256xf32>
    %277 = arith.addf %271, %276 : vector<4x256xf32>
    %278 = vector.extract_strided_slice %237 {offsets = [0, 6], sizes = [4, 1], strides = [1, 1]} : vector<4x12xf32> to vector<4x1xf32>
    %279 = vector.extract_strided_slice %236 {offsets = [2, 0], sizes = [1, 256], strides = [1, 1]} : vector<4x256xf32> to vector<1x256xf32>
    %280 = vector.broadcast %278 : vector<4x1xf32> to vector<4x256xf32>
    %281 = vector.broadcast %279 : vector<1x256xf32> to vector<4x256xf32>
    %282 = arith.mulf %280, %281 : vector<4x256xf32>
    %283 = arith.addf %277, %282 : vector<4x256xf32>
    %284 = vector.extract_strided_slice %237 {offsets = [0, 7], sizes = [4, 1], strides = [1, 1]} : vector<4x12xf32> to vector<4x1xf32>
    %285 = vector.extract_strided_slice %236 {offsets = [3, 0], sizes = [1, 256], strides = [1, 1]} : vector<4x256xf32> to vector<1x256xf32>
    %286 = vector.broadcast %284 : vector<4x1xf32> to vector<4x256xf32>
    %287 = vector.broadcast %285 : vector<1x256xf32> to vector<4x256xf32>
    %288 = arith.mulf %286, %287 : vector<4x256xf32>
    %289 = arith.addf %283, %288 : vector<4x256xf32>
    %c255_i32_48 = arith.constant 255 : i32
    %290 = tpu.dynamic_rotate %236 by %c255_i32_48 dim 1 : vector<4x256xf32>, i32 -> vector<4x256xf32>
    %cst_49 = arith.constant 0.000000e+00 : f32
    %291 = vector.shape_cast %20 : vector<1x256xi1> to vector<1x256xi1>
    %292 = vector.broadcast %291 : vector<1x256xi1> to vector<4x256xi1>
    %293 = vector.broadcast %cst_49 : f32 to vector<4x256xf32>
    %294 = arith.select %292, %290, %293 : vector<4x256xi1>, vector<4x256xf32>
    %295 = vector.extract_strided_slice %237 {offsets = [0, 8], sizes = [4, 1], strides = [1, 1]} : vector<4x12xf32> to vector<4x1xf32>
    %296 = vector.extract_strided_slice %294 {offsets = [0, 0], sizes = [1, 256], strides = [1, 1]} : vector<4x256xf32> to vector<1x256xf32>
    %297 = vector.broadcast %295 : vector<4x1xf32> to vector<4x256xf32>
    %298 = vector.broadcast %296 : vector<1x256xf32> to vector<4x256xf32>
    %299 = arith.mulf %297, %298 : vector<4x256xf32>
    %300 = arith.addf %289, %299 : vector<4x256xf32>
    %301 = vector.extract_strided_slice %237 {offsets = [0, 9], sizes = [4, 1], strides = [1, 1]} : vector<4x12xf32> to vector<4x1xf32>
    %302 = vector.extract_strided_slice %294 {offsets = [1, 0], sizes = [1, 256], strides = [1, 1]} : vector<4x256xf32> to vector<1x256xf32>
    %303 = vector.broadcast %301 : vector<4x1xf32> to vector<4x256xf32>
    %304 = vector.broadcast %302 : vector<1x256xf32> to vector<4x256xf32>
    %305 = arith.mulf %303, %304 : vector<4x256xf32>
    %306 = arith.addf %300, %305 : vector<4x256xf32>
    %307 = vector.extract_strided_slice %237 {offsets = [0, 10], sizes = [4, 1], strides = [1, 1]} : vector<4x12xf32> to vector<4x1xf32>
    %308 = vector.extract_strided_slice %294 {offsets = [2, 0], sizes = [1, 256], strides = [1, 1]} : vector<4x256xf32> to vector<1x256xf32>
    %309 = vector.broadcast %307 : vector<4x1xf32> to vector<4x256xf32>
    %310 = vector.broadcast %308 : vector<1x256xf32> to vector<4x256xf32>
    %311 = arith.mulf %309, %310 : vector<4x256xf32>
    %312 = arith.addf %306, %311 : vector<4x256xf32>
    %313 = vector.extract_strided_slice %237 {offsets = [0, 11], sizes = [4, 1], strides = [1, 1]} : vector<4x12xf32> to vector<4x1xf32>
    %314 = vector.extract_strided_slice %294 {offsets = [3, 0], sizes = [1, 256], strides = [1, 1]} : vector<4x256xf32> to vector<1x256xf32>
    %315 = vector.broadcast %313 : vector<4x1xf32> to vector<4x256xf32>
    %316 = vector.broadcast %314 : vector<1x256xf32> to vector<4x256xf32>
    %317 = arith.mulf %315, %316 : vector<4x256xf32>
    %318 = arith.addf %312, %317 : vector<4x256xf32>
    %c0_50 = arith.constant 0 : index
    %c0_51 = arith.constant 0 : index
    %c0_52 = arith.constant 0 : index
    %319 = vector.load %arg9[%c0_50, %c0_51, %c0_52] : memref<2x4x256xf32, #tpu.memory_space<vmem>>, vector<1x4x256xf32>
    %320 = vector.shape_cast %319 : vector<1x4x256xf32> to vector<4x256xf32>
    %321 = vector.shape_cast %318 : vector<4x256xf32> to vector<1x4x256xf32>
    tpu.vector_store %arg9[%c0_50, %c0_51, %c0_52], %321 {strides = array<i32>} : memref<2x4x256xf32, #tpu.memory_space<vmem>>, vector<1x4x256xf32>,
    %cst_53 = arith.constant dense<0.000000e+00> : vector<4xf32>
    %322 = vector.multi_reduction <add>, %318, %cst_53 [1] : vector<4x256xf32> to vector<4xf32>
    %323 = vector.shape_cast %322 : vector<4xf32> to vector<4x1xf32>
    %324 = arith.addf %227, %323 : vector<4x1xf32>
    %325 = arith.mulf %318, %318 : vector<4x256xf32>
    %cst_54 = arith.constant dense<0.000000e+00> : vector<4xf32>
    %326 = vector.multi_reduction <add>, %325, %cst_54 [1] : vector<4x256xf32> to vector<4xf32>
    %327 = vector.shape_cast %326 : vector<4xf32> to vector<4x1xf32>
    %328 = arith.addf %228, %327 : vector<4x1xf32>
    %c1_55 = arith.constant 1 : index
    %c0_56 = arith.constant 0 : index
    %c0_57 = arith.constant 0 : index
    %329 = vector.load %arg9[%c1_55, %c0_56, %c0_57] : memref<2x4x256xf32, #tpu.memory_space<vmem>>, vector<1x4x256xf32>
    %330 = vector.shape_cast %329 : vector<1x4x256xf32> to vector<4x256xf32>
    %331 = vector.broadcast %223 : vector<4x1xf32> to vector<4x256xf32>
    %332 = arith.mulf %330, %331 : vector<4x256xf32>
    %333 = vector.broadcast %226 : vector<4x1xf32> to vector<4x256xf32>
    %334 = arith.addf %332, %333 : vector<4x256xf32>
    %cst_58 = arith.constant 0.000000e+00 : f32
    %335 = vector.broadcast %cst_58 : f32 to vector<4x256xf32>
    %336 = arith.maximumf %334, %335 : vector<4x256xf32>
    %c0_59 = arith.constant 0 : index
    %c0_60 = arith.constant 0 : index
    %337 = vector.load %arg3[%c0_59, %c0_60] : memref<4x12xf32, #tpu.memory_space<vmem>>, vector<4x12xf32>
    %c1_i32_61 = arith.constant 1 : i32
    %338 = tpu.dynamic_rotate %336 by %c1_i32_61 dim 1 : vector<4x256xf32>, i32 -> vector<4x256xf32>
    %cst_62 = arith.constant 0.000000e+00 : f32
    %339 = vector.shape_cast %18 : vector<1x256xi1> to vector<1x256xi1>
    %340 = vector.broadcast %339 : vector<1x256xi1> to vector<4x256xi1>
    %341 = vector.broadcast %cst_62 : f32 to vector<4x256xf32>
    %342 = arith.select %340, %338, %341 : vector<4x256xi1>, vector<4x256xf32>
    %343 = vector.extract_strided_slice %337 {offsets = [0, 0], sizes = [4, 1], strides = [1, 1]} : vector<4x12xf32> to vector<4x1xf32>
    %344 = vector.extract_strided_slice %342 {offsets = [0, 0], sizes = [1, 256], strides = [1, 1]} : vector<4x256xf32> to vector<1x256xf32>
    %345 = vector.broadcast %343 : vector<4x1xf32> to vector<4x256xf32>
    %346 = vector.broadcast %344 : vector<1x256xf32> to vector<4x256xf32>
    %347 = arith.mulf %345, %346 : vector<4x256xf32>
    %348 = vector.extract_strided_slice %337 {offsets = [0, 1], sizes = [4, 1], strides = [1, 1]} : vector<4x12xf32> to vector<4x1xf32>
    %349 = vector.extract_strided_slice %342 {offsets = [1, 0], sizes = [1, 256], strides = [1, 1]} : vector<4x256xf32> to vector<1x256xf32>
    %350 = vector.broadcast %348 : vector<4x1xf32> to vector<4x256xf32>
    %351 = vector.broadcast %349 : vector<1x256xf32> to vector<4x256xf32>
    %352 = arith.mulf %350, %351 : vector<4x256xf32>
    %353 = arith.addf %347, %352 : vector<4x256xf32>
    %354 = vector.extract_strided_slice %337 {offsets = [0, 2], sizes = [4, 1], strides = [1, 1]} : vector<4x12xf32> to vector<4x1xf32>
    %355 = vector.extract_strided_slice %342 {offsets = [2, 0], sizes = [1, 256], strides = [1, 1]} : vector<4x256xf32> to vector<1x256xf32>
    %356 = vector.broadcast %354 : vector<4x1xf32> to vector<4x256xf32>
    %357 = vector.broadcast %355 : vector<1x256xf32> to vector<4x256xf32>
    %358 = arith.mulf %356, %357 : vector<4x256xf32>
    %359 = arith.addf %353, %358 : vector<4x256xf32>
    %360 = vector.extract_strided_slice %337 {offsets = [0, 3], sizes = [4, 1], strides = [1, 1]} : vector<4x12xf32> to vector<4x1xf32>
    %361 = vector.extract_strided_slice %342 {offsets = [3, 0], sizes = [1, 256], strides = [1, 1]} : vector<4x256xf32> to vector<1x256xf32>
    %362 = vector.broadcast %360 : vector<4x1xf32> to vector<4x256xf32>
    %363 = vector.broadcast %361 : vector<1x256xf32> to vector<4x256xf32>
    %364 = arith.mulf %362, %363 : vector<4x256xf32>
    %365 = arith.addf %359, %364 : vector<4x256xf32>
    %366 = vector.extract_strided_slice %337 {offsets = [0, 4], sizes = [4, 1], strides = [1, 1]} : vector<4x12xf32> to vector<4x1xf32>
    %367 = vector.extract_strided_slice %336 {offsets = [0, 0], sizes = [1, 256], strides = [1, 1]} : vector<4x256xf32> to vector<1x256xf32>
    %368 = vector.broadcast %366 : vector<4x1xf32> to vector<4x256xf32>
    %369 = vector.broadcast %367 : vector<1x256xf32> to vector<4x256xf32>
    %370 = arith.mulf %368, %369 : vector<4x256xf32>
    %371 = arith.addf %365, %370 : vector<4x256xf32>
    %372 = vector.extract_strided_slice %337 {offsets = [0, 5], sizes = [4, 1], strides = [1, 1]} : vector<4x12xf32> to vector<4x1xf32>
    %373 = vector.extract_strided_slice %336 {offsets = [1, 0], sizes = [1, 256], strides = [1, 1]} : vector<4x256xf32> to vector<1x256xf32>
    %374 = vector.broadcast %372 : vector<4x1xf32> to vector<4x256xf32>
    %375 = vector.broadcast %373 : vector<1x256xf32> to vector<4x256xf32>
    %376 = arith.mulf %374, %375 : vector<4x256xf32>
    %377 = arith.addf %371, %376 : vector<4x256xf32>
    %378 = vector.extract_strided_slice %337 {offsets = [0, 6], sizes = [4, 1], strides = [1, 1]} : vector<4x12xf32> to vector<4x1xf32>
    %379 = vector.extract_strided_slice %336 {offsets = [2, 0], sizes = [1, 256], strides = [1, 1]} : vector<4x256xf32> to vector<1x256xf32>
    %380 = vector.broadcast %378 : vector<4x1xf32> to vector<4x256xf32>
    %381 = vector.broadcast %379 : vector<1x256xf32> to vector<4x256xf32>
    %382 = arith.mulf %380, %381 : vector<4x256xf32>
    %383 = arith.addf %377, %382 : vector<4x256xf32>
    %384 = vector.extract_strided_slice %337 {offsets = [0, 7], sizes = [4, 1], strides = [1, 1]} : vector<4x12xf32> to vector<4x1xf32>
    %385 = vector.extract_strided_slice %336 {offsets = [3, 0], sizes = [1, 256], strides = [1, 1]} : vector<4x256xf32> to vector<1x256xf32>
    %386 = vector.broadcast %384 : vector<4x1xf32> to vector<4x256xf32>
    %387 = vector.broadcast %385 : vector<1x256xf32> to vector<4x256xf32>
    %388 = arith.mulf %386, %387 : vector<4x256xf32>
    %389 = arith.addf %383, %388 : vector<4x256xf32>
    %c255_i32_63 = arith.constant 255 : i32
    %390 = tpu.dynamic_rotate %336 by %c255_i32_63 dim 1 : vector<4x256xf32>, i32 -> vector<4x256xf32>
    %cst_64 = arith.constant 0.000000e+00 : f32
    %391 = vector.shape_cast %20 : vector<1x256xi1> to vector<1x256xi1>
    %392 = vector.broadcast %391 : vector<1x256xi1> to vector<4x256xi1>
    %393 = vector.broadcast %cst_64 : f32 to vector<4x256xf32>
    %394 = arith.select %392, %390, %393 : vector<4x256xi1>, vector<4x256xf32>
    %395 = vector.extract_strided_slice %337 {offsets = [0, 8], sizes = [4, 1], strides = [1, 1]} : vector<4x12xf32> to vector<4x1xf32>
    %396 = vector.extract_strided_slice %394 {offsets = [0, 0], sizes = [1, 256], strides = [1, 1]} : vector<4x256xf32> to vector<1x256xf32>
    %397 = vector.broadcast %395 : vector<4x1xf32> to vector<4x256xf32>
    %398 = vector.broadcast %396 : vector<1x256xf32> to vector<4x256xf32>
    %399 = arith.mulf %397, %398 : vector<4x256xf32>
    %400 = arith.addf %389, %399 : vector<4x256xf32>
    %401 = vector.extract_strided_slice %337 {offsets = [0, 9], sizes = [4, 1], strides = [1, 1]} : vector<4x12xf32> to vector<4x1xf32>
    %402 = vector.extract_strided_slice %394 {offsets = [1, 0], sizes = [1, 256], strides = [1, 1]} : vector<4x256xf32> to vector<1x256xf32>
    %403 = vector.broadcast %401 : vector<4x1xf32> to vector<4x256xf32>
    %404 = vector.broadcast %402 : vector<1x256xf32> to vector<4x256xf32>
    %405 = arith.mulf %403, %404 : vector<4x256xf32>
    %406 = arith.addf %400, %405 : vector<4x256xf32>
    %407 = vector.extract_strided_slice %337 {offsets = [0, 10], sizes = [4, 1], strides = [1, 1]} : vector<4x12xf32> to vector<4x1xf32>
    %408 = vector.extract_strided_slice %394 {offsets = [2, 0], sizes = [1, 256], strides = [1, 1]} : vector<4x256xf32> to vector<1x256xf32>
    %409 = vector.broadcast %407 : vector<4x1xf32> to vector<4x256xf32>
    %410 = vector.broadcast %408 : vector<1x256xf32> to vector<4x256xf32>
    %411 = arith.mulf %409, %410 : vector<4x256xf32>
    %412 = arith.addf %406, %411 : vector<4x256xf32>
    %413 = vector.extract_strided_slice %337 {offsets = [0, 11], sizes = [4, 1], strides = [1, 1]} : vector<4x12xf32> to vector<4x1xf32>
    %414 = vector.extract_strided_slice %394 {offsets = [3, 0], sizes = [1, 256], strides = [1, 1]} : vector<4x256xf32> to vector<1x256xf32>
    %415 = vector.broadcast %413 : vector<4x1xf32> to vector<4x256xf32>
    %416 = vector.broadcast %414 : vector<1x256xf32> to vector<4x256xf32>
    %417 = arith.mulf %415, %416 : vector<4x256xf32>
    %418 = arith.addf %412, %417 : vector<4x256xf32>
    %c1_65 = arith.constant 1 : index
    %c0_66 = arith.constant 0 : index
    %c0_67 = arith.constant 0 : index
    %419 = vector.load %arg9[%c1_65, %c0_66, %c0_67] : memref<2x4x256xf32, #tpu.memory_space<vmem>>, vector<1x4x256xf32>
    %420 = vector.shape_cast %419 : vector<1x4x256xf32> to vector<4x256xf32>
    %421 = vector.shape_cast %418 : vector<4x256xf32> to vector<1x4x256xf32>
    tpu.vector_store %arg9[%c1_65, %c0_66, %c0_67], %421 {strides = array<i32>} : memref<2x4x256xf32, #tpu.memory_space<vmem>>, vector<1x4x256xf32>,
    %cst_68 = arith.constant dense<0.000000e+00> : vector<4xf32>
    %422 = vector.multi_reduction <add>, %418, %cst_68 [1] : vector<4x256xf32> to vector<4xf32>
    %423 = vector.shape_cast %422 : vector<4xf32> to vector<4x1xf32>
    %424 = arith.addf %324, %423 : vector<4x1xf32>
    %425 = arith.mulf %418, %418 : vector<4x256xf32>
    %cst_69 = arith.constant dense<0.000000e+00> : vector<4xf32>
    %426 = vector.multi_reduction <add>, %425, %cst_69 [1] : vector<4x256xf32> to vector<4xf32>
    %427 = vector.shape_cast %426 : vector<4xf32> to vector<4x1xf32>
    %428 = arith.addf %328, %427 : vector<4x1xf32>
    %cst_70 = arith.constant 0.001953125 : f32
    %429 = vector.broadcast %cst_70 : f32 to vector<4x1xf32>
    %430 = arith.mulf %424, %429 : vector<4x1xf32>
    %cst_71 = arith.constant 0.001953125 : f32
    %431 = vector.broadcast %cst_71 : f32 to vector<4x1xf32>
    %432 = arith.mulf %428, %431 : vector<4x1xf32>
    %433 = arith.mulf %430, %430 : vector<4x1xf32>
    %434 = arith.subf %432, %433 : vector<4x1xf32>
    %cst_72 = arith.constant 0.000000e+00 : f32
    %435 = vector.broadcast %cst_72 : f32 to vector<4x1xf32>
    %436 = arith.maximumf %434, %435 : vector<4x1xf32>
    %c0_73 = arith.constant 0 : index
    %c0_74 = arith.constant 0 : index
    %437 = vector.load %arg6[%c0_73, %c0_74] : memref<4x1xf32, #tpu.memory_space<vmem>>, vector<4x1xf32>
    %cst_75 = arith.constant 9.99999974E-6 : f32
    %438 = vector.broadcast %cst_75 : f32 to vector<4x1xf32>
    %439 = arith.addf %436, %438 : vector<4x1xf32>
    %440 = math.rsqrt %439 : vector<4x1xf32>
    %441 = arith.mulf %437, %440 : vector<4x1xf32>
    %c0_76 = arith.constant 0 : index
    %c0_77 = arith.constant 0 : index
    %442 = vector.load %arg7[%c0_76, %c0_77] : memref<4x1xf32, #tpu.memory_space<vmem>>, vector<4x1xf32>
    %443 = arith.mulf %430, %441 : vector<4x1xf32>
    %444 = arith.subf %442, %443 : vector<4x1xf32>
    %c0_78 = arith.constant 0 : index
    %c0_79 = arith.constant 0 : index
    %c0_80 = arith.constant 0 : index
    %445 = vector.load %arg9[%c0_78, %c0_79, %c0_80] : memref<2x4x256xf32, #tpu.memory_space<vmem>>, vector<1x4x256xf32>
    %446 = vector.shape_cast %445 : vector<1x4x256xf32> to vector<4x256xf32>
    %447 = vector.broadcast %441 : vector<4x1xf32> to vector<4x256xf32>
    %448 = arith.mulf %446, %447 : vector<4x256xf32>
    %449 = vector.broadcast %444 : vector<4x1xf32> to vector<4x256xf32>
    %450 = arith.addf %448, %449 : vector<4x256xf32>
    %c0_81 = arith.constant 0 : index
    %c0_82 = arith.constant 0 : index
    %c0_83 = arith.constant 0 : index
    %451 = vector.load %arg1[%c0_81, %c0_82, %c0_83] : memref<2x4x256xf32, #tpu.memory_space<vmem>>, vector<1x4x256xf32>
    %452 = vector.shape_cast %451 : vector<1x4x256xf32> to vector<4x256xf32>
    %453 = arith.addf %450, %452 : vector<4x256xf32>
    %cst_84 = arith.constant 0.000000e+00 : f32
    %454 = vector.broadcast %cst_84 : f32 to vector<4x256xf32>
    %455 = arith.maximumf %453, %454 : vector<4x256xf32>
    %c0_85 = arith.constant 0 : index
    %c0_86 = arith.constant 0 : index
    %c0_87 = arith.constant 0 : index
    %456 = vector.load %arg8[%c0_85, %c0_86, %c0_87] : memref<2x4x256xf32, #tpu.memory_space<vmem>>, vector<1x4x256xf32>
    %457 = vector.shape_cast %456 : vector<1x4x256xf32> to vector<4x256xf32>
    %458 = vector.shape_cast %455 : vector<4x256xf32> to vector<1x4x256xf32>
    tpu.vector_store %arg8[%c0_85, %c0_86, %c0_87], %458 {strides = array<i32>} : memref<2x4x256xf32, #tpu.memory_space<vmem>>, vector<1x4x256xf32>,
    %c1_88 = arith.constant 1 : index
    %c0_89 = arith.constant 0 : index
    %c0_90 = arith.constant 0 : index
    %459 = vector.load %arg9[%c1_88, %c0_89, %c0_90] : memref<2x4x256xf32, #tpu.memory_space<vmem>>, vector<1x4x256xf32>
    %460 = vector.shape_cast %459 : vector<1x4x256xf32> to vector<4x256xf32>
    %461 = vector.broadcast %441 : vector<4x1xf32> to vector<4x256xf32>
    %462 = arith.mulf %460, %461 : vector<4x256xf32>
    %463 = vector.broadcast %444 : vector<4x1xf32> to vector<4x256xf32>
    %464 = arith.addf %462, %463 : vector<4x256xf32>
    %c1_91 = arith.constant 1 : index
    %c0_92 = arith.constant 0 : index
    %c0_93 = arith.constant 0 : index
    %465 = vector.load %arg1[%c1_91, %c0_92, %c0_93] : memref<2x4x256xf32, #tpu.memory_space<vmem>>, vector<1x4x256xf32>
    %466 = vector.shape_cast %465 : vector<1x4x256xf32> to vector<4x256xf32>
    %467 = arith.addf %464, %466 : vector<4x256xf32>
    %cst_94 = arith.constant 0.000000e+00 : f32
    %468 = vector.broadcast %cst_94 : f32 to vector<4x256xf32>
    %469 = arith.maximumf %467, %468 : vector<4x256xf32>
    %c1_95 = arith.constant 1 : index
    %c0_96 = arith.constant 0 : index
    %c0_97 = arith.constant 0 : index
    %470 = vector.load %arg8[%c1_95, %c0_96, %c0_97] : memref<2x4x256xf32, #tpu.memory_space<vmem>>, vector<1x4x256xf32>
    %471 = vector.shape_cast %470 : vector<1x4x256xf32> to vector<4x256xf32>
    %472 = vector.shape_cast %469 : vector<4x256xf32> to vector<1x4x256xf32>
    tpu.vector_store %arg8[%c1_95, %c0_96, %c0_97], %472 {strides = array<i32>} : memref<2x4x256xf32, #tpu.memory_space<vmem>>, vector<1x4x256xf32>,
    return
  }
  func.func @transform_0(%arg0: i32) -> (i32, i32, i32) {
    %c0_i32 = arith.constant 0 : i32
    %c0_i32_0 = arith.constant 0 : i32
    %c0_i32_1 = arith.constant 0 : i32
    %c0_i32_2 = arith.constant 0 : i32
    return %c0_i32, %c0_i32_0, %c0_i32_1 : i32, i32, i32
  }
  func.func @transform_1(%arg0: i32) -> (i32, i32) {
    %c0_i32 = arith.constant 0 : i32
    %c0_i32_0 = arith.constant 0 : i32
    %c0_i32_1 = arith.constant 0 : i32
    return %c0_i32, %c0_i32_0 : i32, i32
  }
  func.func @transform_2(%arg0: i32) -> (i32, i32) {
    %c0_i32 = arith.constant 0 : i32
    %c0_i32_0 = arith.constant 0 : i32
    %c0_i32_1 = arith.constant 0 : i32
    return %c0_i32, %c0_i32_0 : i32, i32
  }
  func.func @transform_3(%arg0: i32) -> (i32, i32) {
    %c0_i32 = arith.constant 0 : i32
    %c0_i32_0 = arith.constant 0 : i32
    %c0_i32_1 = arith.constant 0 : i32
    return %c0_i32, %c0_i32_0 : i32, i32
  }
  func.func @transform_4(%arg0: i32) -> (i32, i32) {
    %c0_i32 = arith.constant 0 : i32
    %c0_i32_0 = arith.constant 0 : i32
    %c0_i32_1 = arith.constant 0 : i32
    return %c0_i32, %c0_i32_0 : i32, i32
  }
  func.func @transform_5(%arg0: i32) -> (i32, i32) {
    %c0_i32 = arith.constant 0 : i32
    %c0_i32_0 = arith.constant 0 : i32
    %c0_i32_1 = arith.constant 0 : i32
    return %c0_i32, %c0_i32_0 : i32, i32
  }
  func.func @transform_6(%arg0: i32) -> (i32, i32) {
    %c0_i32 = arith.constant 0 : i32
    %c0_i32_0 = arith.constant 0 : i32
    %c0_i32_1 = arith.constant 0 : i32
    return %c0_i32, %c0_i32_0 : i32, i32
  }
  func.func @transform_7(%arg0: i32) -> (i32, i32, i32) {
    %c0_i32 = arith.constant 0 : i32
    %c0_i32_0 = arith.constant 0 : i32
    %c0_i32_1 = arith.constant 0 : i32
    %c0_i32_2 = arith.constant 0 : i32
    return %c0_i32, %c0_i32_0, %c0_i32_1 : i32, i32, i32
  }
}

</mosaic_0001>

<llo_original>
// kernel: tpu_custom_call.1
$region0: #{tpu_custom_call.1}
  #allocation0 [shape = 'u32[]', space=smem, size = 0x4, offset = 0x4, fixed_abs, tag = 'smem constant byte address 0x4 - core index']
  #allocation1 [shape = 'u32[144,128]{1,0:T(1,128)}', space=vmem, size = 0x12000, scoped, tag = 'internal scratch']
  #allocation2 [shape = 'f32[2,4,256]{2,1,0:T(4,128)}', space=vmem, size = 0x2000, scoped, tag = 'scratch operand']
  %s0 = inlined_call_operand.vmem [shape: f32[2,4,256], index: 0, kind: input, shape index: {}]
  %s1 = inlined_call_operand.vmem [shape: f32[4,12], index: 1, kind: input, shape index: {}]
  %s2 = inlined_call_operand.hbm [shape: f32[4,12], index: 2, kind: input, shape index: {}]
  %s3 = inlined_call_operand.vmem [shape: f32[4,1], index: 3, kind: input, shape index: {}]
  %s4 = inlined_call_operand.vmem [shape: f32[4,1], index: 4, kind: input, shape index: {}]
  %s5 = inlined_call_operand.vmem [shape: f32[4,1], index: 5, kind: input, shape index: {}]
  %s6 = inlined_call_operand.vmem [shape: f32[4,1], index: 6, kind: input, shape index: {}]
  %s7 = inlined_call_operand.hbm [shape: f32[2,4,256], index: 7, kind: output, shape index: {}]
  %s8 = sld [smem:[#allocation0]]
  $region42: #{tpu_custom_call.1} parent=0
    _
  %s10 = ssub.s32 1, %s8
  %s11 = scalar_select 0, %s10, %s8
  $region1: #{tpu_custom_call.1} parent=0
    #allocation3 [shape = 'u8[2048]{0}', space=vmem, size = 0x800, scoped, tag = 'input window, operand 2, single buffered']
    #allocation4 [shape = 's32[1]{0}', space=sflag, size = 0x4, scoped, tag = 'scoped memory for tpu_custom_call.1']
    #allocation5 [shape = 's32[1]{0}', space=sflag, size = 0x4, scoped, tag = 'scoped memory for tpu_custom_call.1']
    #allocation6 [shape = 'u8[8192]{0}', space=vmem, size = 0x2000, scoped, tag = 'output window, operand 0, single buffered']
    %12 = vsyncpa [#allocation4], 0
    %13 = vsyncpa [#allocation5], 0
    // Predicated region
    $region2: #{tpu_custom_call.1} parent=1 // pred_check
      _
    $region3: #{tpu_custom_call.1} parent=1 // pred_check_branch
      %15 = sbr.rel (0) target = $region5
    $region4: #{tpu_custom_call.1} parent=1 // pred_region
      _
    $region5: #{tpu_custom_call.1} parent=1 // pred_fallthru
      _
    // Predicated region
    $region6: #{tpu_custom_call.1} parent=1 // pred_check
      _
    $region7: #{tpu_custom_call.1} parent=1 // pred_check_branch
      %17 = sbr.rel (0) target = $region9
    $region8: #{tpu_custom_call.1} parent=1 // pred_region
      _
    $region9: #{tpu_custom_call.1} parent=1 // pred_fallthru
      _
    // Predicated region
    $region10: #{tpu_custom_call.1} parent=1 // pred_check
      _
    $region11: #{tpu_custom_call.1} parent=1 // pred_check_branch
      %19 = sbr.rel (0) target = $region13
    $region12: #{tpu_custom_call.1} parent=1 // pred_region
      %s21 = ssub.s32 64, 64
      %22 = vsyncadd [#allocation4], %s21
      %s24 = sshll.u32 [#allocation3], 4
      %s25 = int_to_ptr.vmem [resolvable:$true] %s24
      %27 = dma.hbm_to_vmem [thread:$0]  %s2, 64, %s25, [#allocation4]
    $region13: #{tpu_custom_call.1} parent=1 // pred_fallthru
      _
    // Predicated region
    $region14: #{tpu_custom_call.1} parent=1 // pred_check
      _
    $region15: #{tpu_custom_call.1} parent=1 // pred_check_branch
      %29 = sbr.rel (0) target = $region17
    $region16: #{tpu_custom_call.1} parent=1 // pred_region
      _
    $region17: #{tpu_custom_call.1} parent=1 // pred_fallthru
      _
    // Predicated region
    $region18: #{tpu_custom_call.1} parent=1 // pred_check
      _
    $region19: #{tpu_custom_call.1} parent=1 // pred_check_branch
      %31 = sbr.rel (0) target = $region21
    $region20: #{tpu_custom_call.1} parent=1 // pred_region
      _
    $region21: #{tpu_custom_call.1} parent=1 // pred_fallthru
      _
    // Predicated region
    $region22: #{tpu_custom_call.1} parent=1 // pred_check
      _
    $region23: #{tpu_custom_call.1} parent=1 // pred_check_branch
      %33 = sbr.rel (0) target = $region25
    $region24: #{tpu_custom_call.1} parent=1 // pred_region
      _
    $region25: #{tpu_custom_call.1} parent=1 // pred_fallthru
      _
    // Predicated region
    $region26: #{tpu_custom_call.1} parent=1 // pred_check
      _
    $region27: #{tpu_custom_call.1} parent=1 // pred_check_branch
      %35 = sbr.rel (0) target = $region29
    $region28: #{tpu_custom_call.1} parent=1 // pred_region
      _
    $region29: #{tpu_custom_call.1} parent=1 // pred_fallthru
      _
    // Predicated region
    $region30: #{tpu_custom_call.1} parent=1 // pred_check
      _
    $region31: #{tpu_custom_call.1} parent=1 // pred_check_branch
      %37 = sbr.rel (0) target = $region33
    $region32: #{tpu_custom_call.1} parent=1 // pred_region
      %38 = dma.done [#allocation4], 64
    $region33: #{tpu_custom_call.1} parent=1 // pred_fallthru
      _
    %v39 = vlaneseq
    %v40 = vand.u32 %v39, 127
    %v41 = vadd.s32 %v40, 128
    %vm42 = vcmp.lt.s32.totalorder %v40, 0
    %v43 = vsub.s32 0, %v40
    %v44 = vsel %vm42, %v43, %v40
    %v45 = vshrl.u32 %v44, 4
    %v46 = vand.u32 %v44, 15
    %v47 = vsub.s32 0, %v46
    %v48 = vsel %vm42, %v47, %v46
    %vm49 = vcmp.lt.s32.totalorder %v41, 0
    %v50 = vsub.s32 0, %v41
    %v51 = vsel %vm49, %v50, %v41
    %v52 = vshrl.u32 %v51, 4
    %v53 = vand.u32 %v51, 15
    %v54 = vsub.s32 0, %v53
    %v55 = vsel %vm49, %v54, %v53
    %vm56 = vcmp.ne.s32.totalorder %v48, 0
    %vm57 = vcmp.ne.s32.totalorder %v55, 0
    %vm58 = vcmp.lt.s32.totalorder %v48, 0
    %vm59 = vcmp.lt.s32.totalorder %v55, 0
    %vm60 = vmand %vm58, %vm56
    %vm61 = vmand %vm59, %vm57
    %v62 = vadd.s32 %v48, 16
    %v63 = vadd.s32 %v55, 16
    %v64 = vsel %vm60, %v62, %v48
    %v65 = vsel %vm61, %v63, %v55
    %vm66 = vcmp.ne.s32.totalorder %v64, 0
    %vm67 = vcmp.ne.s32.totalorder %v65, 0
    %vm68 = vcmp.ne.s32.totalorder %v64, 15
    %vm69 = vcmp.ne.s32.totalorder %v65, 15
    %v70 = vld [vmem:[%s0] sm:$0xff]
    %v71 = vld [vmem:[%s1] sm:$0xf]
    %v73 = vcombine.high %v70, %v70
    %75 = vrot.lane.b32.xlu0 %v70, 1
    %v76 = vpop.permute.xlu0 %75
    %77 = vrot.lane.b32.xlu0 %v73, 1
    %v78 = vpop.permute.xlu0 %77
    %vm79 = vcmp.lt.s32.totalorder %v40, 1
    %v80 = vsel %vm79, %v76, %v78
    %v81 = vsel %vm79, %v78, %v76
    %v82 = vsel %vm66, 1, 0
    %v83 = vsel %vm67, 1, 0
    %vm84 = vcmp.eq.s32.totalorder %v82, 1
    %vm85 = vcmp.eq.s32.totalorder %v83, 1
    %v86 = vsel %vm84, %v81, 0.0
    %v87 = vsel %vm85, %v80, 0.0
    %89 = vset.pattern.permute.xlu0 0
    %90 = vperm.xlu0 %89, %v71
    %v91 = vpop.permute.xlu0 %90
    %v93 = vlaneseq
    %v94 = vshrl.u32 %v93, 7
    %v95 = vsub.s32 0, %v94
    %v96 = vrot.slane %v86, %v95
    %v97 = vlaneseq
    %v98 = vshrl.u32 %v97, 7
    %v99 = vsub.s32 0, %v98
    %v100 = vrot.slane %v87, %v99
    %v101 = vmul.f32 %v91, %v96
    %v102 = vmul.f32 %v91, %v100
    %103 = vset.pattern.permute.xlu0 1
    %104 = vperm.xlu0 %103, %v71
    %v105 = vpop.permute.xlu0 %104
    %v107 = vlaneseq
    %v108 = vshrl.u32 %v107, 7
    %v109 = vsub.s32 1, %v108
    %v110 = vrot.slane %v86, %v109
    %v111 = vlaneseq
    %v112 = vshrl.u32 %v111, 7
    %v113 = vsub.s32 1, %v112
    %v114 = vrot.slane %v87, %v113
    %v115 = vmul.f32 %v105, %v110
    %v116 = vmul.f32 %v105, %v114
    %v117 = vadd.f32 %v101, %v115
    %v118 = vadd.f32 %v102, %v116
    %119 = vset.pattern.permute.xlu0 2
    %120 = vperm.xlu0 %119, %v71
    %v121 = vpop.permute.xlu0 %120
    %v123 = vlaneseq
    %v124 = vshrl.u32 %v123, 7
    %v125 = vsub.s32 2, %v124
    %v126 = vrot.slane %v86, %v125
    %v127 = vlaneseq
    %v128 = vshrl.u32 %v127, 7
    %v129 = vsub.s32 2, %v128
    %v130 = vrot.slane %v87, %v129
    %v131 = vmul.f32 %v121, %v126
    %v132 = vmul.f32 %v121, %v130
    %v133 = vadd.f32 %v117, %v131
    %v134 = vadd.f32 %v118, %v132
    %135 = vset.pattern.permute.xlu0 3
    %136 = vperm.xlu0 %135, %v71
    %v137 = vpop.permute.xlu0 %136
    %v139 = vlaneseq
    %v140 = vshrl.u32 %v139, 7
    %v141 = vsub.s32 3, %v140
    %v142 = vrot.slane %v86, %v141
    %v143 = vlaneseq
    %v144 = vshrl.u32 %v143, 7
    %v145 = vsub.s32 3, %v144
    %v146 = vrot.slane %v87, %v145
    %v147 = vmul.f32 %v137, %v142
    %v148 = vmul.f32 %v137, %v146
    %v149 = vadd.f32 %v133, %v147
    %v150 = vadd.f32 %v134, %v148
    %151 = vset.pattern.permute.xlu0 4
    %152 = vperm.xlu0 %151, %v71
    %v153 = vpop.permute.xlu0 %152
    %v155 = vlaneseq
    %v156 = vshrl.u32 %v155, 7
    %v157 = vsub.s32 0, %v156
    %v158 = vrot.slane %v70, %v157
    %v159 = vlaneseq
    %v160 = vshrl.u32 %v159, 7
    %v161 = vsub.s32 4, %v160
    %v162 = vrot.slane %v70, %v161
    %v165 = vlaneseq
    %v166 = vshrl.u32 %v165, 7
    %v167 = vsub.s32 0, %v166
    %v168 = vrot.slane %v158, %v167
    %v169 = vlaneseq
    %v170 = vshrl.u32 %v169, 7
    %v171 = vsub.s32 0, %v170
    %v172 = vrot.slane %v162, %v171
    %v173 = vmul.f32 %v153, %v168
    %v174 = vmul.f32 %v153, %v172
    %v175 = vadd.f32 %v149, %v173
    %v176 = vadd.f32 %v150, %v174
    %177 = vset.pattern.permute.xlu0 5
    %178 = vperm.xlu0 %177, %v71
    %v179 = vpop.permute.xlu0 %178
    %v181 = vlaneseq
    %v182 = vshrl.u32 %v181, 7
    %v183 = vsub.s32 1, %v182
    %v184 = vrot.slane %v70, %v183
    %v185 = vlaneseq
    %v186 = vshrl.u32 %v185, 7
    %v187 = vsub.s32 5, %v186
    %v188 = vrot.slane %v70, %v187
    %v191 = vlaneseq
    %v192 = vshrl.u32 %v191, 7
    %v193 = vsub.s32 1, %v192
    %v194 = vrot.slane %v184, %v193
    %v195 = vlaneseq
    %v196 = vshrl.u32 %v195, 7
    %v197 = vsub.s32 1, %v196
    %v198 = vrot.slane %v188, %v197
    %v199 = vmul.f32 %v179, %v194
    %v200 = vmul.f32 %v179, %v198
    %v201 = vadd.f32 %v175, %v199
    %v202 = vadd.f32 %v176, %v200
    %203 = vset.pattern.permute.xlu0 6
    %204 = vperm.xlu0 %203, %v71
    %v205 = vpop.permute.xlu0 %204
    %v207 = vlaneseq
    %v208 = vshrl.u32 %v207, 7
    %v209 = vsub.s32 2, %v208
    %v210 = vrot.slane %v70, %v209
    %v211 = vlaneseq
    %v212 = vshrl.u32 %v211, 7
    %v213 = vsub.s32 6, %v212
    %v214 = vrot.slane %v70, %v213
    %v217 = vlaneseq
    %v218 = vshrl.u32 %v217, 7
    %v219 = vsub.s32 2, %v218
    %v220 = vrot.slane %v210, %v219
    %v221 = vlaneseq
    %v222 = vshrl.u32 %v221, 7
    %v223 = vsub.s32 2, %v222
    %v224 = vrot.slane %v214, %v223
    %v225 = vmul.f32 %v205, %v220
    %v226 = vmul.f32 %v205, %v224
    %v227 = vadd.f32 %v201, %v225
    %v228 = vadd.f32 %v202, %v226
    %229 = vset.pattern.permute.xlu0 7
    %230 = vperm.xlu0 %229, %v71
    %v231 = vpop.permute.xlu0 %230
    %v233 = vlaneseq
    %v234 = vshrl.u32 %v233, 7
    %v235 = vsub.s32 3, %v234
    %v236 = vrot.slane %v70, %v235
    %v237 = vlaneseq
    %v238 = vshrl.u32 %v237, 7
    %v239 = vsub.s32 7, %v238
    %v240 = vrot.slane %v70, %v239
    %v243 = vlaneseq
    %v244 = vshrl.u32 %v243, 7
    %v245 = vsub.s32 3, %v244
    %v246 = vrot.slane %v236, %v245
    %v247 = vlaneseq
    %v248 = vshrl.u32 %v247, 7
    %v249 = vsub.s32 3, %v248
    %v250 = vrot.slane %v240, %v249
    %v251 = vmul.f32 %v231, %v246
    %v252 = vmul.f32 %v231, %v250
    %v253 = vadd.f32 %v227, %v251
    %v254 = vadd.f32 %v228, %v252
    %255 = vrot.lane.b32.xlu0 %v70, 127
    %v256 = vpop.permute.xlu0 %255
    %257 = vrot.lane.b32.xlu0 %v73, 127
    %v258 = vpop.permute.xlu0 %257
    %vm259 = vcmp.lt.s32.totalorder %v40, 127
    %v260 = vsel %vm259, %v256, %v258
    %v261 = vsel %vm259, %v258, %v256
    %v262 = vsel %vm68, 1, 0
    %v263 = vsel %vm69, 1, 0
    %vm264 = vcmp.eq.s32.totalorder %v262, 1
    %vm265 = vcmp.eq.s32.totalorder %v263, 1
    %v266 = vsel %vm264, %v260, 0.0
    %v267 = vsel %vm265, %v261, 0.0
    %268 = vset.pattern.permute.xlu0 8
    %269 = vperm.xlu0 %268, %v71
    %v270 = vpop.permute.xlu0 %269
    %v272 = vlaneseq
    %v273 = vshrl.u32 %v272, 7
    %v274 = vsub.s32 0, %v273
    %v275 = vrot.slane %v266, %v274
    %v276 = vlaneseq
    %v277 = vshrl.u32 %v276, 7
    %v278 = vsub.s32 0, %v277
    %v279 = vrot.slane %v267, %v278
    %v280 = vmul.f32 %v270, %v275
    %v281 = vmul.f32 %v270, %v279
    %v282 = vadd.f32 %v253, %v280
    %v283 = vadd.f32 %v254, %v281
    %284 = vset.pattern.permute.xlu0 9
    %285 = vperm.xlu0 %284, %v71
    %v286 = vpop.permute.xlu0 %285
    %v288 = vlaneseq
    %v289 = vshrl.u32 %v288, 7
    %v290 = vsub.s32 1, %v289
    %v291 = vrot.slane %v266, %v290
    %v292 = vlaneseq
    %v293 = vshrl.u32 %v292, 7
    %v294 = vsub.s32 1, %v293
    %v295 = vrot.slane %v267, %v294
    %v296 = vmul.f32 %v286, %v291
    %v297 = vmul.f32 %v286, %v295
    %v298 = vadd.f32 %v282, %v296
    %v299 = vadd.f32 %v283, %v297
    %300 = vset.pattern.permute.xlu0 10
    %301 = vperm.xlu0 %300, %v71
    %v302 = vpop.permute.xlu0 %301
    %v304 = vlaneseq
    %v305 = vshrl.u32 %v304, 7
    %v306 = vsub.s32 2, %v305
    %v307 = vrot.slane %v266, %v306
    %v308 = vlaneseq
    %v309 = vshrl.u32 %v308, 7
    %v310 = vsub.s32 2, %v309
    %v311 = vrot.slane %v267, %v310
    %v312 = vmul.f32 %v302, %v307
    %v313 = vmul.f32 %v302, %v311
    %v314 = vadd.f32 %v298, %v312
    %v315 = vadd.f32 %v299, %v313
    %316 = vset.pattern.permute.xlu0 11
    %317 = vperm.xlu0 %316, %v71
    %v318 = vpop.permute.xlu0 %317
    %v320 = vlaneseq
    %v321 = vshrl.u32 %v320, 7
    %v322 = vsub.s32 3, %v321
    %v323 = vrot.slane %v266, %v322
    %v324 = vlaneseq
    %v325 = vshrl.u32 %v324, 7
    %v326 = vsub.s32 3, %v325
    %v327 = vrot.slane %v267, %v326
    %v328 = vmul.f32 %v318, %v323
    %v329 = vmul.f32 %v318, %v327
    %v330 = vadd.f32 %v314, %v328
    %v331 = vadd.f32 %v315, %v329
    %v334 = vcombine.low %v330, %v331
    %336 = vst [vmem:[#allocation2] sm:$0xff] %v334
    %vm337 = vcmask 1043456
    %v338 = vsel %vm337, %v330, 0.0
    %v339 = vsel %vm337, %v331, 0.0
    %v340 = vadd.f32 %v338, %v339
    %341 = vadd.xlane.f32.xlu0 %v340
    %v342 = vpop.xlane.xlu0 %341
    %v343 = vadd.f32 %v342, 0.0
    %v344 = vmul.f32 %v330, %v330
    %v345 = vmul.f32 %v331, %v331
    %v346 = vsel %vm337, %v344, 0.0
    %v347 = vsel %vm337, %v345, 0.0
    %v348 = vadd.f32 %v346, %v347
    %349 = vadd.xlane.f32.xlu0 %v348
    %v350 = vpop.xlane.xlu0 %349
    %v351 = vadd.f32 %v350, 0.0
    %s352 = scalar_lea.vmem %s0, 8
    %v353 = vld [vmem:[%s352] sm:$0xff]
    %v354 = vld [vmem:[%s1] sm:$0xf]
    %v356 = vcombine.high %v353, %v353
    %358 = vrot.lane.b32.xlu0 %v353, 1
    %v359 = vpop.permute.xlu0 %358
    %360 = vrot.lane.b32.xlu0 %v356, 1
    %v361 = vpop.permute.xlu0 %360
    %v362 = vsel %vm79, %v359, %v361
    %v363 = vsel %vm79, %v361, %v359
    %v364 = vsel %vm84, %v363, 0.0
    %v365 = vsel %vm85, %v362, 0.0
    %367 = vset.pattern.permute.xlu0 0
    %368 = vperm.xlu0 %367, %v354
    %v369 = vpop.permute.xlu0 %368
    %v371 = vlaneseq
    %v372 = vshrl.u32 %v371, 7
    %v373 = vsub.s32 0, %v372
    %v374 = vrot.slane %v364, %v373
    %v375 = vlaneseq
    %v376 = vshrl.u32 %v375, 7
    %v377 = vsub.s32 0, %v376
    %v378 = vrot.slane %v365, %v377
    %v379 = vmul.f32 %v369, %v374
    %v380 = vmul.f32 %v369, %v378
    %381 = vset.pattern.permute.xlu0 1
    %382 = vperm.xlu0 %381, %v354
    %v383 = vpop.permute.xlu0 %382
    %v385 = vlaneseq
    %v386 = vshrl.u32 %v385, 7
    %v387 = vsub.s32 1, %v386
    %v388 = vrot.slane %v364, %v387
    %v389 = vlaneseq
    %v390 = vshrl.u32 %v389, 7
    %v391 = vsub.s32 1, %v390
    %v392 = vrot.slane %v365, %v391
    %v393 = vmul.f32 %v383, %v388
    %v394 = vmul.f32 %v383, %v392
    %v395 = vadd.f32 %v379, %v393
    %v396 = vadd.f32 %v380, %v394
    %397 = vset.pattern.permute.xlu0 2
    %398 = vperm.xlu0 %397, %v354
    %v399 = vpop.permute.xlu0 %398
    %v401 = vlaneseq
    %v402 = vshrl.u32 %v401, 7
    %v403 = vsub.s32 2, %v402
    %v404 = vrot.slane %v364, %v403
    %v405 = vlaneseq
    %v406 = vshrl.u32 %v405, 7
    %v407 = vsub.s32 2, %v406
    %v408 = vrot.slane %v365, %v407
    %v409 = vmul.f32 %v399, %v404
    %v410 = vmul.f32 %v399, %v408
    %v411 = vadd.f32 %v395, %v409
    %v412 = vadd.f32 %v396, %v410
    %413 = vset.pattern.permute.xlu0 3
    %414 = vperm.xlu0 %413, %v354
    %v415 = vpop.permute.xlu0 %414
    %v417 = vlaneseq
    %v418 = vshrl.u32 %v417, 7
    %v419 = vsub.s32 3, %v418
    %v420 = vrot.slane %v364, %v419
    %v421 = vlaneseq
    %v422 = vshrl.u32 %v421, 7
    %v423 = vsub.s32 3, %v422
    %v424 = vrot.slane %v365, %v423
    %v425 = vmul.f32 %v415, %v420
    %v426 = vmul.f32 %v415, %v424
    %v427 = vadd.f32 %v411, %v425
    %v428 = vadd.f32 %v412, %v426
    %429 = vset.pattern.permute.xlu0 4
    %430 = vperm.xlu0 %429, %v354
    %v431 = vpop.permute.xlu0 %430
    %v433 = vlaneseq
    %v434 = vshrl.u32 %v433, 7
    %v435 = vsub.s32 0, %v434
    %v436 = vrot.slane %v353, %v435
    %v437 = vlaneseq
    %v438 = vshrl.u32 %v437, 7
    %v439 = vsub.s32 4, %v438
    %v440 = vrot.slane %v353, %v439
    %v443 = vlaneseq
    %v444 = vshrl.u32 %v443, 7
    %v445 = vsub.s32 0, %v444
    %v446 = vrot.slane %v436, %v445
    %v447 = vlaneseq
    %v448 = vshrl.u32 %v447, 7
    %v449 = vsub.s32 0, %v448
    %v450 = vrot.slane %v440, %v449
    %v451 = vmul.f32 %v431, %v446
    %v452 = vmul.f32 %v431, %v450
    %v453 = vadd.f32 %v427, %v451
    %v454 = vadd.f32 %v428, %v452
    %455 = vset.pattern.permute.xlu0 5
    %456 = vperm.xlu0 %455, %v354
    %v457 = vpop.permute.xlu0 %456
    %v459 = vlaneseq
    %v460 = vshrl.u32 %v459, 7
    %v461 = vsub.s32 1, %v460
    %v462 = vrot.slane %v353, %v461
    %v463 = vlaneseq
    %v464 = vshrl.u32 %v463, 7
    %v465 = vsub.s32 5, %v464
    %v466 = vrot.slane %v353, %v465
    %v469 = vlaneseq
    %v470 = vshrl.u32 %v469, 7
    %v471 = vsub.s32 1, %v470
    %v472 = vrot.slane %v462, %v471
    %v473 = vlaneseq
    %v474 = vshrl.u32 %v473, 7
    %v475 = vsub.s32 1, %v474
    %v476 = vrot.slane %v466, %v475
    %v477 = vmul.f32 %v457, %v472
    %v478 = vmul.f32 %v457, %v476
    %v479 = vadd.f32 %v453, %v477
    %v480 = vadd.f32 %v454, %v478
    %481 = vset.pattern.permute.xlu0 6
    %482 = vperm.xlu0 %481, %v354
    %v483 = vpop.permute.xlu0 %482
    %v485 = vlaneseq
    %v486 = vshrl.u32 %v485, 7
    %v487 = vsub.s32 2, %v486
    %v488 = vrot.slane %v353, %v487
    %v489 = vlaneseq
    %v490 = vshrl.u32 %v489, 7
    %v491 = vsub.s32 6, %v490
    %v492 = vrot.slane %v353, %v491
    %v495 = vlaneseq
    %v496 = vshrl.u32 %v495, 7
    %v497 = vsub.s32 2, %v496
    %v498 = vrot.slane %v488, %v497
    %v499 = vlaneseq
    %v500 = vshrl.u32 %v499, 7
    %v501 = vsub.s32 2, %v500
    %v502 = vrot.slane %v492, %v501
    %v503 = vmul.f32 %v483, %v498
    %v504 = vmul.f32 %v483, %v502
    %v505 = vadd.f32 %v479, %v503
    %v506 = vadd.f32 %v480, %v504
    %507 = vset.pattern.permute.xlu0 7
    %508 = vperm.xlu0 %507, %v354
    %v509 = vpop.permute.xlu0 %508
    %v511 = vlaneseq
    %v512 = vshrl.u32 %v511, 7
    %v513 = vsub.s32 3, %v512
    %v514 = vrot.slane %v353, %v513
    %v515 = vlaneseq
    %v516 = vshrl.u32 %v515, 7
    %v517 = vsub.s32 7, %v516
    %v518 = vrot.slane %v353, %v517
    %v521 = vlaneseq
    %v522 = vshrl.u32 %v521, 7
    %v523 = vsub.s32 3, %v522
    %v524 = vrot.slane %v514, %v523
    %v525 = vlaneseq
    %v526 = vshrl.u32 %v525, 7
    %v527 = vsub.s32 3, %v526
    %v528 = vrot.slane %v518, %v527
    %v529 = vmul.f32 %v509, %v524
    %v530 = vmul.f32 %v509, %v528
    %v531 = vadd.f32 %v505, %v529
    %v532 = vadd.f32 %v506, %v530
    %533 = vrot.lane.b32.xlu0 %v353, 127
    %v534 = vpop.permute.xlu0 %533
    %535 = vrot.lane.b32.xlu0 %v356, 127
    %v536 = vpop.permute.xlu0 %535
    %v537 = vsel %vm259, %v534, %v536
    %v538 = vsel %vm259, %v536, %v534
    %v539 = vsel %vm264, %v537, 0.0
    %v540 = vsel %vm265, %v538, 0.0
    %541 = vset.pattern.permute.xlu0 8
    %542 = vperm.xlu0 %541, %v354
    %v543 = vpop.permute.xlu0 %542
    %v545 = vlaneseq
    %v546 = vshrl.u32 %v545, 7
    %v547 = vsub.s32 0, %v546
    %v548 = vrot.slane %v539, %v547
    %v549 = vlaneseq
    %v550 = vshrl.u32 %v549, 7
    %v551 = vsub.s32 0, %v550
    %v552 = vrot.slane %v540, %v551
    %v553 = vmul.f32 %v543, %v548
    %v554 = vmul.f32 %v543, %v552
    %v555 = vadd.f32 %v531, %v553
    %v556 = vadd.f32 %v532, %v554
    %557 = vset.pattern.permute.xlu0 9
    %558 = vperm.xlu0 %557, %v354
    %v559 = vpop.permute.xlu0 %558
    %v561 = vlaneseq
    %v562 = vshrl.u32 %v561, 7
    %v563 = vsub.s32 1, %v562
    %v564 = vrot.slane %v539, %v563
    %v565 = vlaneseq
    %v566 = vshrl.u32 %v565, 7
    %v567 = vsub.s32 1, %v566
    %v568 = vrot.slane %v540, %v567
    %v569 = vmul.f32 %v559, %v564
    %v570 = vmul.f32 %v559, %v568
    %v571 = vadd.f32 %v555, %v569
    %v572 = vadd.f32 %v556, %v570
    %573 = vset.pattern.permute.xlu0 10
    %574 = vperm.xlu0 %573, %v354
    %v575 = vpop.permute.xlu0 %574
    %v577 = vlaneseq
    %v578 = vshrl.u32 %v577, 7
    %v579 = vsub.s32 2, %v578
    %v580 = vrot.slane %v539, %v579
    %v581 = vlaneseq
    %v582 = vshrl.u32 %v581, 7
    %v583 = vsub.s32 2, %v582
    %v584 = vrot.slane %v540, %v583
    %v585 = vmul.f32 %v575, %v580
    %v586 = vmul.f32 %v575, %v584
    %v587 = vadd.f32 %v571, %v585
    %v588 = vadd.f32 %v572, %v586
    %589 = vset.pattern.permute.xlu0 11
    %590 = vperm.xlu0 %589, %v354
    %v591 = vpop.permute.xlu0 %590
    %v593 = vlaneseq
    %v594 = vshrl.u32 %v593, 7
    %v595 = vsub.s32 3, %v594
    %v596 = vrot.slane %v539, %v595
    %v597 = vlaneseq
    %v598 = vshrl.u32 %v597, 7
    %v599 = vsub.s32 3, %v598
    %v600 = vrot.slane %v540, %v599
    %v601 = vmul.f32 %v591, %v596
    %v602 = vmul.f32 %v591, %v600
    %v603 = vadd.f32 %v587, %v601
    %v604 = vadd.f32 %v588, %v602
    %v607 = vcombine.low %v603, %v604
    %s609 = scalar_lea.vmem [#allocation2], 8
    %610 = vst [vmem:[%s609] sm:$0xff] %v607
    %v611 = vsel %vm337, %v603, 0.0
    %v612 = vsel %vm337, %v604, 0.0
    %v613 = vadd.f32 %v611, %v612
    %614 = vadd.xlane.f32.xlu0 %v613
    %v615 = vpop.xlane.xlu0 %614
    %v616 = vadd.f32 %v343, %v615
    %v617 = vmul.f32 %v603, %v603
    %v618 = vmul.f32 %v604, %v604
    %v619 = vsel %vm337, %v617, 0.0
    %v620 = vsel %vm337, %v618, 0.0
    %v621 = vadd.f32 %v619, %v620
    %622 = vadd.xlane.f32.xlu0 %v621
    %v623 = vpop.xlane.xlu0 %622
    %v624 = vadd.f32 %v351, %v623
    %v625 = vmul.f32 %v616, 0.001953125
    %v626 = vmul.f32 %v624, 0.001953125
    %v627 = vmul.f32 %v625, %v625
    %v628 = vsub.f32 %v626, %v627
    %v629 = vmax.f32 %v628, 0.0
    %v630 = vld [vmem:[%s3] sm:$0xf]
    %v631 = vadd.f32 %v629, 1e-05
    %v632 = vrsqrt.pop %v631
    %v633 = vmul.f32 %v630, %v632
    %v634 = vld [vmem:[%s4] sm:$0xf]
    %v635 = vmul.f32 %v625, %v633
    %v636 = vsub.f32 %v634, %v635
    %v637 = vld [vmem:[#allocation2] sm:$0xff]
    %639 = vset.pattern.permute.xlu0 0
    %640 = vperm.xlu0 %639, %v633
    %v641 = vpop.permute.xlu0 %640
    %v643 = vunpack.c.l.s4 839922192
    %v644 = vunpack.c.0.s8 %v643
    %v645 = vlaneseq
    %v646 = vshrl.u32 %v645, 7
    %v647 = vsub.s32 %v644, %v646
    %v648 = vrot.slane %v641, %v647
    %v650 = vmul.f32 %v637, %v648
    %652 = vset.pattern.permute.xlu0 0
    %653 = vperm.xlu0 %652, %v636
    %v654 = vpop.permute.xlu0 %653
    %v656 = vunpack.c.l.s4 839922192
    %v657 = vunpack.c.0.s8 %v656
    %v658 = vlaneseq
    %v659 = vshrl.u32 %v658, 7
    %v660 = vsub.s32 %v657, %v659
    %v661 = vrot.slane %v654, %v660
    %v663 = vadd.f32 %v650, %v661
    %v664 = vmax.f32 %v663, 0.0
    %v665 = vld [vmem:[#allocation3] sm:$0xf]
    %v667 = vcombine.high %v664, %v664
    %669 = vrot.lane.b32.xlu0 %v664, 1
    %v670 = vpop.permute.xlu0 %669
    %671 = vrot.lane.b32.xlu0 %v667, 1
    %v672 = vpop.permute.xlu0 %671
    %v673 = vsel %vm79, %v670, %v672
    %v674 = vsel %vm79, %v672, %v670
    %v675 = vsel %vm84, %v674, 0.0
    %v676 = vsel %vm85, %v673, 0.0
    %678 = vset.pattern.permute.xlu0 0
    %679 = vperm.xlu0 %678, %v665
    %v680 = vpop.permute.xlu0 %679
    %v682 = vlaneseq
    %v683 = vshrl.u32 %v682, 7
    %v684 = vsub.s32 0, %v683
    %v685 = vrot.slane %v675, %v684
    %v686 = vlaneseq
    %v687 = vshrl.u32 %v686, 7
    %v688 = vsub.s32 0, %v687
    %v689 = vrot.slane %v676, %v688
    %v690 = vmul.f32 %v680, %v685
    %v691 = vmul.f32 %v680, %v689
    %692 = vset.pattern.permute.xlu0 1
    %693 = vperm.xlu0 %692, %v665
    %v694 = vpop.permute.xlu0 %693
    %v696 = vlaneseq
    %v697 = vshrl.u32 %v696, 7
    %v698 = vsub.s32 1, %v697
    %v699 = vrot.slane %v675, %v698
    %v700 = vlaneseq
    %v701 = vshrl.u32 %v700, 7
    %v702 = vsub.s32 1, %v701
    %v703 = vrot.slane %v676, %v702
    %v704 = vmul.f32 %v694, %v699
    %v705 = vmul.f32 %v694, %v703
    %v706 = vadd.f32 %v690, %v704
    %v707 = vadd.f32 %v691, %v705
    %708 = vset.pattern.permute.xlu0 2
    %709 = vperm.xlu0 %708, %v665
    %v710 = vpop.permute.xlu0 %709
    %v712 = vlaneseq
    %v713 = vshrl.u32 %v712, 7
    %v714 = vsub.s32 2, %v713
    %v715 = vrot.slane %v675, %v714
    %v716 = vlaneseq
    %v717 = vshrl.u32 %v716, 7
    %v718 = vsub.s32 2, %v717
    %v719 = vrot.slane %v676, %v718
    %v720 = vmul.f32 %v710, %v715
    %v721 = vmul.f32 %v710, %v719
    %v722 = vadd.f32 %v706, %v720
    %v723 = vadd.f32 %v707, %v721
    %724 = vset.pattern.permute.xlu0 3
    %725 = vperm.xlu0 %724, %v665
    %v726 = vpop.permute.xlu0 %725
    %v728 = vlaneseq
    %v729 = vshrl.u32 %v728, 7
    %v730 = vsub.s32 3, %v729
    %v731 = vrot.slane %v675, %v730
    %v732 = vlaneseq
    %v733 = vshrl.u32 %v732, 7
    %v734 = vsub.s32 3, %v733
    %v735 = vrot.slane %v676, %v734
    %v736 = vmul.f32 %v726, %v731
    %v737 = vmul.f32 %v726, %v735
    %v738 = vadd.f32 %v722, %v736
    %v739 = vadd.f32 %v723, %v737
    %740 = vset.pattern.permute.xlu0 4
    %741 = vperm.xlu0 %740, %v665
    %v742 = vpop.permute.xlu0 %741
    %v744 = vlaneseq
    %v745 = vshrl.u32 %v744, 7
    %v746 = vsub.s32 0, %v745
    %v747 = vrot.slane %v664, %v746
    %v748 = vlaneseq
    %v749 = vshrl.u32 %v748, 7
    %v750 = vsub.s32 4, %v749
    %v751 = vrot.slane %v664, %v750
    %v754 = vlaneseq
    %v755 = vshrl.u32 %v754, 7
    %v756 = vsub.s32 0, %v755
    %v757 = vrot.slane %v747, %v756
    %v758 = vlaneseq
    %v759 = vshrl.u32 %v758, 7
    %v760 = vsub.s32 0, %v759
    %v761 = vrot.slane %v751, %v760
    %v762 = vmul.f32 %v742, %v757
    %v763 = vmul.f32 %v742, %v761
    %v764 = vadd.f32 %v738, %v762
    %v765 = vadd.f32 %v739, %v763
    %766 = vset.pattern.permute.xlu0 5
    %767 = vperm.xlu0 %766, %v665
    %v768 = vpop.permute.xlu0 %767
    %v770 = vlaneseq
    %v771 = vshrl.u32 %v770, 7
    %v772 = vsub.s32 1, %v771
    %v773 = vrot.slane %v664, %v772
    %v774 = vlaneseq
    %v775 = vshrl.u32 %v774, 7
    %v776 = vsub.s32 5, %v775
    %v777 = vrot.slane %v664, %v776
    %v780 = vlaneseq
    %v781 = vshrl.u32 %v780, 7
    %v782 = vsub.s32 1, %v781
    %v783 = vrot.slane %v773, %v782
    %v784 = vlaneseq
    %v785 = vshrl.u32 %v784, 7
    %v786 = vsub.s32 1, %v785
    %v787 = vrot.slane %v777, %v786
    %v788 = vmul.f32 %v768, %v783
    %v789 = vmul.f32 %v768, %v787
    %v790 = vadd.f32 %v764, %v788
    %v791 = vadd.f32 %v765, %v789
    %792 = vset.pattern.permute.xlu0 6
    %793 = vperm.xlu0 %792, %v665
    %v794 = vpop.permute.xlu0 %793
    %v796 = vlaneseq
    %v797 = vshrl.u32 %v796, 7
    %v798 = vsub.s32 2, %v797
    %v799 = vrot.slane %v664, %v798
    %v800 = vlaneseq
    %v801 = vshrl.u32 %v800, 7
    %v802 = vsub.s32 6, %v801
    %v803 = vrot.slane %v664, %v802
    %v806 = vlaneseq
    %v807 = vshrl.u32 %v806, 7
    %v808 = vsub.s32 2, %v807
    %v809 = vrot.slane %v799, %v808
    %v810 = vlaneseq
    %v811 = vshrl.u32 %v810, 7
    %v812 = vsub.s32 2, %v811
    %v813 = vrot.slane %v803, %v812
    %v814 = vmul.f32 %v794, %v809
    %v815 = vmul.f32 %v794, %v813
    %v816 = vadd.f32 %v790, %v814
    %v817 = vadd.f32 %v791, %v815
    %818 = vset.pattern.permute.xlu0 7
    %819 = vperm.xlu0 %818, %v665
    %v820 = vpop.permute.xlu0 %819
    %v822 = vlaneseq
    %v823 = vshrl.u32 %v822, 7
    %v824 = vsub.s32 3, %v823
    %v825 = vrot.slane %v664, %v824
    %v826 = vlaneseq
    %v827 = vshrl.u32 %v826, 7
    %v828 = vsub.s32 7, %v827
    %v829 = vrot.slane %v664, %v828
    %v832 = vlaneseq
    %v833 = vshrl.u32 %v832, 7
    %v834 = vsub.s32 3, %v833
    %v835 = vrot.slane %v825, %v834
    %v836 = vlaneseq
    %v837 = vshrl.u32 %v836, 7
    %v838 = vsub.s32 3, %v837
    %v839 = vrot.slane %v829, %v838
    %v840 = vmul.f32 %v820, %v835
    %v841 = vmul.f32 %v820, %v839
    %v842 = vadd.f32 %v816, %v840
    %v843 = vadd.f32 %v817, %v841
    %844 = vrot.lane.b32.xlu0 %v664, 127
    %v845 = vpop.permute.xlu0 %844
    %846 = vrot.lane.b32.xlu0 %v667, 127
    %v847 = vpop.permute.xlu0 %846
    %v848 = vsel %vm259, %v845, %v847
    %v849 = vsel %vm259, %v847, %v845
    %v850 = vsel %vm264, %v848, 0.0
    %v851 = vsel %vm265, %v849, 0.0
    %852 = vset.pattern.permute.xlu0 8
    %853 = vperm.xlu0 %852, %v665
    %v854 = vpop.permute.xlu0 %853
    %v856 = vlaneseq
    %v857 = vshrl.u32 %v856, 7
    %v858 = vsub.s32 0, %v857
    %v859 = vrot.slane %v850, %v858
    %v860 = vlaneseq
    %v861 = vshrl.u32 %v860, 7
    %v862 = vsub.s32 0, %v861
    %v863 = vrot.slane %v851, %v862
    %v864 = vmul.f32 %v854, %v859
    %v865 = vmul.f32 %v854, %v863
    %v866 = vadd.f32 %v842, %v864
    %v867 = vadd.f32 %v843, %v865
    %868 = vset.pattern.permute.xlu0 9
    %869 = vperm.xlu0 %868, %v665
    %v870 = vpop.permute.xlu0 %869
    %v872 = vlaneseq
    %v873 = vshrl.u32 %v872, 7
    %v874 = vsub.s32 1, %v873
    %v875 = vrot.slane %v850, %v874
    %v876 = vlaneseq
    %v877 = vshrl.u32 %v876, 7
    %v878 = vsub.s32 1, %v877
    %v879 = vrot.slane %v851, %v878
    %v880 = vmul.f32 %v870, %v875
    %v881 = vmul.f32 %v870, %v879
    %v882 = vadd.f32 %v866, %v880
    %v883 = vadd.f32 %v867, %v881
    %884 = vset.pattern.permute.xlu0 10
    %885 = vperm.xlu0 %884, %v665
    %v886 = vpop.permute.xlu0 %885
    %v888 = vlaneseq
    %v889 = vshrl.u32 %v888, 7
    %v890 = vsub.s32 2, %v889
    %v891 = vrot.slane %v850, %v890
    %v892 = vlaneseq
    %v893 = vshrl.u32 %v892, 7
    %v894 = vsub.s32 2, %v893
    %v895 = vrot.slane %v851, %v894
    %v896 = vmul.f32 %v886, %v891
    %v897 = vmul.f32 %v886, %v895
    %v898 = vadd.f32 %v882, %v896
    %v899 = vadd.f32 %v883, %v897
    %900 = vset.pattern.permute.xlu0 11
    %901 = vperm.xlu0 %900, %v665
    %v902 = vpop.permute.xlu0 %901
    %v904 = vlaneseq
    %v905 = vshrl.u32 %v904, 7
    %v906 = vsub.s32 3, %v905
    %v907 = vrot.slane %v850, %v906
    %v908 = vlaneseq
    %v909 = vshrl.u32 %v908, 7
    %v910 = vsub.s32 3, %v909
    %v911 = vrot.slane %v851, %v910
    %v912 = vmul.f32 %v902, %v907
    %v913 = vmul.f32 %v902, %v911
    %v914 = vadd.f32 %v898, %v912
    %v915 = vadd.f32 %v899, %v913
    %v918 = vcombine.low %v914, %v915
    %920 = vst [vmem:[#allocation2] sm:$0xff] %v918
    %v921 = vsel %vm337, %v914, 0.0
    %v922 = vsel %vm337, %v915, 0.0
    %v923 = vadd.f32 %v921, %v922
    %924 = vadd.xlane.f32.xlu0 %v923
    %v925 = vpop.xlane.xlu0 %924
    %v926 = vadd.f32 %v925, 0.0
    %v927 = vmul.f32 %v914, %v914
    %v928 = vmul.f32 %v915, %v915
    %v929 = vsel %vm337, %v927, 0.0
    %v930 = vsel %vm337, %v928, 0.0
    %v931 = vadd.f32 %v929, %v930
    %932 = vadd.xlane.f32.xlu0 %v931
    %v933 = vpop.xlane.xlu0 %932
    %v934 = vadd.f32 %v933, 0.0
    %v935 = vld [vmem:[%s609] sm:$0xff]
    %v936 = vmul.f32 %v935, %v648
    %v937 = vadd.f32 %v936, %v661
    %v938 = vmax.f32 %v937, 0.0
    %v939 = vld [vmem:[#allocation3] sm:$0xf]
    %v941 = vcombine.high %v938, %v938
    %943 = vrot.lane.b32.xlu0 %v938, 1
    %v944 = vpop.permute.xlu0 %943
    %945 = vrot.lane.b32.xlu0 %v941, 1
    %v946 = vpop.permute.xlu0 %945
    %v947 = vsel %vm79, %v944, %v946
    %v948 = vsel %vm79, %v946, %v944
    %v949 = vsel %vm84, %v948, 0.0
    %v950 = vsel %vm85, %v947, 0.0
    %952 = vset.pattern.permute.xlu0 0
    %953 = vperm.xlu0 %952, %v939
    %v954 = vpop.permute.xlu0 %953
    %v956 = vlaneseq
    %v957 = vshrl.u32 %v956, 7
    %v958 = vsub.s32 0, %v957
    %v959 = vrot.slane %v949, %v958
    %v960 = vlaneseq
    %v961 = vshrl.u32 %v960, 7
    %v962 = vsub.s32 0, %v961
    %v963 = vrot.slane %v950, %v962
    %v964 = vmul.f32 %v954, %v959
    %v965 = vmul.f32 %v954, %v963
    %966 = vset.pattern.permute.xlu0 1
    %967 = vperm.xlu0 %966, %v939
    %v968 = vpop.permute.xlu0 %967
    %v970 = vlaneseq
    %v971 = vshrl.u32 %v970, 7
    %v972 = vsub.s32 1, %v971
    %v973 = vrot.slane %v949, %v972
    %v974 = vlaneseq
    %v975 = vshrl.u32 %v974, 7
    %v976 = vsub.s32 1, %v975
    %v977 = vrot.slane %v950, %v976
    %v978 = vmul.f32 %v968, %v973
    %v979 = vmul.f32 %v968, %v977
    %v980 = vadd.f32 %v964, %v978
    %v981 = vadd.f32 %v965, %v979
    %982 = vset.pattern.permute.xlu0 2
    %983 = vperm.xlu0 %982, %v939
    %v984 = vpop.permute.xlu0 %983
    %v986 = vlaneseq
    %v987 = vshrl.u32 %v986, 7
    %v988 = vsub.s32 2, %v987
    %v989 = vrot.slane %v949, %v988
    %v990 = vlaneseq
    %v991 = vshrl.u32 %v990, 7
    %v992 = vsub.s32 2, %v991
    %v993 = vrot.slane %v950, %v992
    %v994 = vmul.f32 %v984, %v989
    %v995 = vmul.f32 %v984, %v993
    %v996 = vadd.f32 %v980, %v994
    %v997 = vadd.f32 %v981, %v995
    %998 = vset.pattern.permute.xlu0 3
    %999 = vperm.xlu0 %998, %v939
    %v1000 = vpop.permute.xlu0 %999
    %v1002 = vlaneseq
    %v1003 = vshrl.u32 %v1002, 7
    %v1004 = vsub.s32 3, %v1003
    %v1005 = vrot.slane %v949, %v1004
    %v1006 = vlaneseq
    %v1007 = vshrl.u32 %v1006, 7
    %v1008 = vsub.s32 3, %v1007
    %v1009 = vrot.slane %v950, %v1008
    %v1010 = vmul.f32 %v1000, %v1005
    %v1011 = vmul.f32 %v1000, %v1009
    %v1012 = vadd.f32 %v996, %v1010
    %v1013 = vadd.f32 %v997, %v1011
    %1014 = vset.pattern.permute.xlu0 4
    %1015 = vperm.xlu0 %1014, %v939
    %v1016 = vpop.permute.xlu0 %1015
    %v1018 = vlaneseq
    %v1019 = vshrl.u32 %v1018, 7
    %v1020 = vsub.s32 0, %v1019
    %v1021 = vrot.slane %v938, %v1020
    %v1022 = vlaneseq
    %v1023 = vshrl.u32 %v1022, 7
    %v1024 = vsub.s32 4, %v1023
    %v1025 = vrot.slane %v938, %v1024
    %v1028 = vlaneseq
    %v1029 = vshrl.u32 %v1028, 7
    %v1030 = vsub.s32 0, %v1029
    %v1031 = vrot.slane %v1021, %v1030
    %v1032 = vlaneseq
    %v1033 = vshrl.u32 %v1032, 7
    %v1034 = vsub.s32 0, %v1033
    %v1035 = vrot.slane %v1025, %v1034
    %v1036 = vmul.f32 %v1016, %v1031
    %v1037 = vmul.f32 %v1016, %v1035
    %v1038 = vadd.f32 %v1012, %v1036
    %v1039 = vadd.f32 %v1013, %v1037
    %1040 = vset.pattern.permute.xlu0 5
    %1041 = vperm.xlu0 %1040, %v939
    %v1042 = vpop.permute.xlu0 %1041
    %v1044 = vlaneseq
    %v1045 = vshrl.u32 %v1044, 7
    %v1046 = vsub.s32 1, %v1045
    %v1047 = vrot.slane %v938, %v1046
    %v1048 = vlaneseq
    %v1049 = vshrl.u32 %v1048, 7
    %v1050 = vsub.s32 5, %v1049
    %v1051 = vrot.slane %v938, %v1050
    %v1054 = vlaneseq
    %v1055 = vshrl.u32 %v1054, 7
    %v1056 = vsub.s32 1, %v1055
    %v1057 = vrot.slane %v1047, %v1056
    %v1058 = vlaneseq
    %v1059 = vshrl.u32 %v1058, 7
    %v1060 = vsub.s32 1, %v1059
    %v1061 = vrot.slane %v1051, %v1060
    %v1062 = vmul.f32 %v1042, %v1057
    %v1063 = vmul.f32 %v1042, %v1061
    %v1064 = vadd.f32 %v1038, %v1062
    %v1065 = vadd.f32 %v1039, %v1063
    %1066 = vset.pattern.permute.xlu0 6
    %1067 = vperm.xlu0 %1066, %v939
    %v1068 = vpop.permute.xlu0 %1067
    %v1070 = vlaneseq
    %v1071 = vshrl.u32 %v1070, 7
    %v1072 = vsub.s32 2, %v1071
    %v1073 = vrot.slane %v938, %v1072
    %v1074 = vlaneseq
    %v1075 = vshrl.u32 %v1074, 7
    %v1076 = vsub.s32 6, %v1075
    %v1077 = vrot.slane %v938, %v1076
    %v1080 = vlaneseq
    %v1081 = vshrl.u32 %v1080, 7
    %v1082 = vsub.s32 2, %v1081
    %v1083 = vrot.slane %v1073, %v1082
    %v1084 = vlaneseq
    %v1085 = vshrl.u32 %v1084, 7
    %v1086 = vsub.s32 2, %v1085
    %v1087 = vrot.slane %v1077, %v1086
    %v1088 = vmul.f32 %v1068, %v1083
    %v1089 = vmul.f32 %v1068, %v1087
    %v1090 = vadd.f32 %v1064, %v1088
    %v1091 = vadd.f32 %v1065, %v1089
    %1092 = vset.pattern.permute.xlu0 7
    %1093 = vperm.xlu0 %1092, %v939
    %v1094 = vpop.permute.xlu0 %1093
    %v1096 = vlaneseq
    %v1097 = vshrl.u32 %v1096, 7
    %v1098 = vsub.s32 3, %v1097
    %v1099 = vrot.slane %v938, %v1098
    %v1100 = vlaneseq
    %v1101 = vshrl.u32 %v1100, 7
    %v1102 = vsub.s32 7, %v1101
    %v1103 = vrot.slane %v938, %v1102
    %v1106 = vlaneseq
    %v1107 = vshrl.u32 %v1106, 7
    %v1108 = vsub.s32 3, %v1107
    %v1109 = vrot.slane %v1099, %v1108
    %v1110 = vlaneseq
    %v1111 = vshrl.u32 %v1110, 7
    %v1112 = vsub.s32 3, %v1111
    %v1113 = vrot.slane %v1103, %v1112
    %v1114 = vmul.f32 %v1094, %v1109
    %v1115 = vmul.f32 %v1094, %v1113
    %v1116 = vadd.f32 %v1090, %v1114
    %v1117 = vadd.f32 %v1091, %v1115
    %1118 = vrot.lane.b32.xlu0 %v938, 127
    %v1119 = vpop.permute.xlu0 %1118
    %1120 = vrot.lane.b32.xlu0 %v941, 127
    %v1121 = vpop.permute.xlu0 %1120
    %v1122 = vsel %vm259, %v1119, %v1121
    %v1123 = vsel %vm259, %v1121, %v1119
    %v1124 = vsel %vm264, %v1122, 0.0
    %v1125 = vsel %vm265, %v1123, 0.0
    %1126 = vset.pattern.permute.xlu0 8
    %1127 = vperm.xlu0 %1126, %v939
    %v1128 = vpop.permute.xlu0 %1127
    %v1130 = vlaneseq
    %v1131 = vshrl.u32 %v1130, 7
    %v1132 = vsub.s32 0, %v1131
    %v1133 = vrot.slane %v1124, %v1132
    %v1134 = vlaneseq
    %v1135 = vshrl.u32 %v1134, 7
    %v1136 = vsub.s32 0, %v1135
    %v1137 = vrot.slane %v1125, %v1136
    %v1138 = vmul.f32 %v1128, %v1133
    %v1139 = vmul.f32 %v1128, %v1137
    %v1140 = vadd.f32 %v1116, %v1138
    %v1141 = vadd.f32 %v1117, %v1139
    %1142 = vset.pattern.permute.xlu0 9
    %1143 = vperm.xlu0 %1142, %v939
    %v1144 = vpop.permute.xlu0 %1143
    %v1146 = vlaneseq
    %v1147 = vshrl.u32 %v1146, 7
    %v1148 = vsub.s32 1, %v1147
    %v1149 = vrot.slane %v1124, %v1148
    %v1150 = vlaneseq
    %v1151 = vshrl.u32 %v1150, 7
    %v1152 = vsub.s32 1, %v1151
    %v1153 = vrot.slane %v1125, %v1152
    %v1154 = vmul.f32 %v1144, %v1149
    %v1155 = vmul.f32 %v1144, %v1153
    %v1156 = vadd.f32 %v1140, %v1154
    %v1157 = vadd.f32 %v1141, %v1155
    %1158 = vset.pattern.permute.xlu0 10
    %1159 = vperm.xlu0 %1158, %v939
    %v1160 = vpop.permute.xlu0 %1159
    %v1162 = vlaneseq
    %v1163 = vshrl.u32 %v1162, 7
    %v1164 = vsub.s32 2, %v1163
    %v1165 = vrot.slane %v1124, %v1164
    %v1166 = vlaneseq
    %v1167 = vshrl.u32 %v1166, 7
    %v1168 = vsub.s32 2, %v1167
    %v1169 = vrot.slane %v1125, %v1168
    %v1170 = vmul.f32 %v1160, %v1165
    %v1171 = vmul.f32 %v1160, %v1169
    %v1172 = vadd.f32 %v1156, %v1170
    %v1173 = vadd.f32 %v1157, %v1171
    %1174 = vset.pattern.permute.xlu0 11
    %1175 = vperm.xlu0 %1174, %v939
    %v1176 = vpop.permute.xlu0 %1175
    %v1178 = vlaneseq
    %v1179 = vshrl.u32 %v1178, 7
    %v1180 = vsub.s32 3, %v1179
    %v1181 = vrot.slane %v1124, %v1180
    %v1182 = vlaneseq
    %v1183 = vshrl.u32 %v1182, 7
    %v1184 = vsub.s32 3, %v1183
    %v1185 = vrot.slane %v1125, %v1184
    %v1186 = vmul.f32 %v1176, %v1181
    %v1187 = vmul.f32 %v1176, %v1185
    %v1188 = vadd.f32 %v1172, %v1186
    %v1189 = vadd.f32 %v1173, %v1187
    %v1192 = vcombine.low %v1188, %v1189
    %1194 = vst [vmem:[%s609] sm:$0xff] %v1192
    %v1195 = vsel %vm337, %v1188, 0.0
    %v1196 = vsel %vm337, %v1189, 0.0
    %v1197 = vadd.f32 %v1195, %v1196
    %1198 = vadd.xlane.f32.xlu0 %v1197
    %v1199 = vpop.xlane.xlu0 %1198
    %v1200 = vadd.f32 %v926, %v1199
    %v1201 = vmul.f32 %v1188, %v1188
    %v1202 = vmul.f32 %v1189, %v1189
    %v1203 = vsel %vm337, %v1201, 0.0
    %v1204 = vsel %vm337, %v1202, 0.0
    %v1205 = vadd.f32 %v1203, %v1204
    %1206 = vadd.xlane.f32.xlu0 %v1205
    %v1207 = vpop.xlane.xlu0 %1206
    %v1208 = vadd.f32 %v934, %v1207
    %v1209 = vmul.f32 %v1200, 0.001953125
    %v1210 = vmul.f32 %v1208, 0.001953125
    %v1211 = vmul.f32 %v1209, %v1209
    %v1212 = vsub.f32 %v1210, %v1211
    %v1213 = vmax.f32 %v1212, 0.0
    %v1214 = vld [vmem:[%s5] sm:$0xf]
    %v1215 = vadd.f32 %v1213, 1e-05
    %v1216 = vrsqrt.pop %v1215
    %v1217 = vmul.f32 %v1214, %v1216
    %v1218 = vld [vmem:[%s6] sm:$0xf]
    %v1219 = vmul.f32 %v1209, %v1217
    %v1220 = vsub.f32 %v1218, %v1219
    %v1221 = vld [vmem:[#allocation2] sm:$0xff]
    %1223 = vset.pattern.permute.xlu0 0
    %1224 = vperm.xlu0 %1223, %v1217
    %v1225 = vpop.permute.xlu0 %1224
    %v1227 = vunpack.c.l.s4 839922192
    %v1228 = vunpack.c.0.s8 %v1227
    %v1229 = vlaneseq
    %v1230 = vshrl.u32 %v1229, 7
    %v1231 = vsub.s32 %v1228, %v1230
    %v1232 = vrot.slane %v1225, %v1231
    %v1234 = vmul.f32 %v1221, %v1232
    %1236 = vset.pattern.permute.xlu0 0
    %1237 = vperm.xlu0 %1236, %v1220
    %v1238 = vpop.permute.xlu0 %1237
    %v1240 = vunpack.c.l.s4 839922192
    %v1241 = vunpack.c.0.s8 %v1240
    %v1242 = vlaneseq
    %v1243 = vshrl.u32 %v1242, 7
    %v1244 = vsub.s32 %v1241, %v1243
    %v1245 = vrot.slane %v1238, %v1244
    %v1247 = vadd.f32 %v1234, %v1245
    %v1248 = vld [vmem:[%s0] sm:$0xff]
    %v1249 = vadd.f32 %v1247, %v1248
    %v1250 = vmax.f32 %v1249, 0.0
    %1251 = vst [vmem:[#allocation6] sm:$0xff] %v1250
    %v1252 = vld [vmem:[%s609] sm:$0xff]
    %v1253 = vmul.f32 %v1252, %v1232
    %v1254 = vadd.f32 %v1253, %v1245
    %v1255 = vld [vmem:[%s352] sm:$0xff]
    %v1256 = vadd.f32 %v1254, %v1255
    %v1257 = vmax.f32 %v1256, 0.0
    %s1258 = scalar_lea.vmem [#allocation6], 8
    %1259 = vst [vmem:[%s1258] sm:$0xff] %v1257
    // Predicated region
    $region34: #{tpu_custom_call.1} parent=1 // pred_check
      _
    $region35: #{tpu_custom_call.1} parent=1 // pred_check_branch
      %1261 = sbr.rel (0) target = $region37
    $region36: #{tpu_custom_call.1} parent=1 // pred_region
      %s1263 = ssub.s32 256, 256
      %1264 = vsyncadd [#allocation5], %s1263
      %s1265 = sshll.u32 [#allocation6], 4
      %s1266 = int_to_ptr.vmem [resolvable:$true] %s1265
      %1271 = dma.vmem_to_hbm [thread:$0]  %s1266, 256, %s7, [#allocation5], 128, 128, 8
    $region37: #{tpu_custom_call.1} parent=1 // pred_fallthru
      _
    // Predicated region
    $region38: #{tpu_custom_call.1} parent=1 // pred_check
      _
    $region39: #{tpu_custom_call.1} parent=1 // pred_check_branch
      %1273 = sbr.rel (0) target = $region41
    $region40: #{tpu_custom_call.1} parent=1 // pred_region
      %1274 = dma.done [#allocation5], 256
    $region41: #{tpu_custom_call.1} parent=1 // pred_fallthru
      _
    %1275 = vsyncpa [#allocation4], 1
    %1276 = vsyncpa [#allocation5], 1

</llo_original>
